<compile_context>
chip_gen: v7x
topology: tpu7x:2x2x1
jax: 0.10.0
libtpu: 0.0.40
codegen_flags: <defaults>
</compile_context>

<pallas_src>
import functools

import jax
import jax.numpy as jnp
from jax.experimental import pallas as pl
from jax.experimental.pallas import tpu as pltpu


# ---------------------------------------------------------------------------
# Fused Pallas kernel (one grid step = one batch chunk, premise|hypothesis stacked)
# ---------------------------------------------------------------------------

def _snli_fused_kernel(ids_ref, tbl_ref, whh_ref, w1_ref, b1_ref,
                       w2_ref, b2_ref, wo_ref, bo_ref, out_ref, *, S, BC):
    H = whh_ref.shape[0]
    NV = tbl_ref.shape[0]          # padded vocab size
    R = 2 * BC                     # premise rows | hypothesis rows per timestep

    # --- embedding gather + projection(+embed BN) + input-to-hidden matmul + bias,
    #     all folded into tbl (bf16): one one-hot bf16 MXU matmul yields gates_x for
    #     every (t, row) of both sequences at once, accumulated in f32.
    ids = ids_ref[...]                                                    # (S*R, 1) i32
    onehot = (ids == jax.lax.broadcasted_iota(jnp.int32, (S * R, NV), 1)
              ).astype(jnp.bfloat16)                                      # exact 0/1
    gates_x = jnp.dot(onehot, tbl_ref[...],
                      preferred_element_type=jnp.float32)                 # (S*R, 4H) f32

    # --- LSTM recurrence, gate order [i, f, o | g] (reordered at fold time), fully
    #     unrolled; only the small bf16 recurrent matmul + gate math is serial.
    whh = whh_ref[...]                                                    # bf16 (H, 4H)
    h = jnp.zeros((R, H), jnp.float32)
    c = jnp.zeros((R, H), jnp.float32)
    for t in range(S):
        g = gates_x[t * R:(t + 1) * R, :] + jnp.dot(
            h.astype(jnp.bfloat16), whh, preferred_element_type=jnp.float32)
        sig = jax.nn.sigmoid(g[:, 0:3 * H])      # contiguous [i | f | o]
        g_g = jnp.tanh(g[:, 3 * H:4 * H])        # only the g quarter
        i_g = sig[:, 0:H]
        f_g = sig[:, H:2 * H]
        o_g = sig[:, 2 * H:3 * H]
        c = f_g * c + i_g * g_g
        h = o_g * jnp.tanh(c)

    # --- head: Feature (feat-BN folded, concat([p,h,p-h,p*h]) algebraically reduced to
    #     [p, q, p*q] @ W1) + MLP (each BN folded into the next Linear) + output layer.
    p = h[0:BC, :]                # premise final hidden state   (BC, H)
    q = h[BC:R, :]                # hypothesis final hidden state (BC, H)
    feats = jnp.concatenate([p, q, p * q], axis=1)                        # (BC, 3H)
    y1 = jnp.maximum(
        jnp.dot(feats, w1_ref[...], preferred_element_type=jnp.float32) + b1_ref[...],
        0.0)
    y2 = jnp.maximum(
        jnp.dot(y1, w2_ref[...], preferred_element_type=jnp.float32) + b2_ref[...],
        0.0)
    out_ref[...] = (jnp.dot(y2, wo_ref[...], preferred_element_type=jnp.float32)
                    + bo_ref[...])


@jax.jit
def snli_forward(premise_ids, hypothesis_ids, F):
    """premise_ids / hypothesis_ids: (S, B) int32.  F: folded weights (see fold_params)."""
    S, B = premise_ids.shape
    d_out = F["wo"].shape[1]
    BC = 8 if (B % 8 == 0) else B          # batch chunk (sublane-aligned when possible)
    NC = B // BC

    # per-chunk, time-major ids: chunk c holds [premise cols | hypothesis cols] per step
    prem = premise_ids.reshape(S, NC, BC).transpose(1, 0, 2)              # (NC, S, BC)
    hypo = hypothesis_ids.reshape(S, NC, BC).transpose(1, 0, 2)
    ids = jnp.concatenate([prem, hypo], axis=2)                           # (NC, S, 2BC)
    ids = ids.reshape(NC * S * 2 * BC, 1).astype(jnp.int32)

    kern = functools.partial(_snli_fused_kernel, S=S, BC=BC)

    def resident(w):  # full-array block, constant index_map -> DMA'd once, VMEM-resident
        return pl.BlockSpec(w.shape, lambda c: (0, 0))

    return pl.pallas_call(
        kern,
        grid=(NC,),
        in_specs=[
            pl.BlockSpec((S * 2 * BC, 1), lambda c: (c, 0)),              # ids, per chunk
            resident(F["tbl"]), resident(F["whh"]),
            resident(F["w1"]), resident(F["b1"]),
            resident(F["w2"]), resident(F["b2"]),
            resident(F["wo"]), resident(F["bo"]),
        ],
        out_specs=pl.BlockSpec((BC, d_out), lambda c: (c, 0)),
        out_shape=jax.ShapeDtypeStruct((B, d_out), jnp.float32),
        compiler_params=pltpu.CompilerParams(dimension_semantics=("parallel",)),
    )(ids, F["tbl"], F["whh"], F["w1"], F["b1"], F["w2"], F["b2"], F["wo"], F["bo"])


# ---------------------------------------------------------------------------
# One-time weight preparation (plain JAX). Exact algebraic folds, valid in eval mode
# (Dropout=identity, BatchNorm uses running stats -> affine scale/shift); the only
# approximation is the bf16 cast of the MXU-facing tensors (tbl, whh).
# ---------------------------------------------------------------------------

def bn_scale_shift(gamma, beta, mean, var, eps=1e-5):
    scale = gamma / jnp.sqrt(var + eps)
    return scale, beta - mean * scale


def fold_params(P, cfg):
    H = cfg["d_hidden"]

    # projection + embed-BN + W_ih + (b_ih+b_hh) folded into one per-token gate table:
    #   gates_x[id] = embed[id] @ ((Wp*psc) @ W_ih) + (bp @ W_ih + b)
    # the bias folds into every row since each one-hot row sums to exactly 1.
    psc, psh = bn_scale_shift(*P["embed_bn"])
    wp = P["proj_w"] * psc[None, :]
    bp = P["proj_b"] * psc + psh
    tbl = (P["embed"] @ wp) @ P["lstm_wih"]                       # (n_embed, 4H)
    bgx = bp @ P["lstm_wih"] + P["lstm_b"]                        # (4H,)
    tbl = tbl + bgx[None, :]
    nv = tbl.shape[0]
    nvp = ((nv + 127) // 128) * 128                               # pad vocab for clean MXU K
    tbl = jnp.pad(tbl, ((0, nvp - nv), (0, 0)))

    # reorder gate columns [i,f,g,o] -> [i,f,o,g] so sigmoid is a contiguous 3H range
    perm = jnp.concatenate([jnp.arange(0, 2 * H),
                            jnp.arange(3 * H, 4 * H),
                            jnp.arange(2 * H, 3 * H)])
    tbl = tbl[:, perm]
    whh = P["lstm_whh"][:, perm]

    # feature BN folded into MLP layer 1; concat([p,h,p-h,p*h]) reduced to [p,h,p*h]:
    #   concat @ (fsc ⊙ W1) = p@(A+C) + h@(B-C) + (p*h)@D  -> stacked (3H, d_mlp)
    fsc, fsh = bn_scale_shift(*P["feat_bn"])
    w1, b1, bn1 = P["mlp"][0]
    w1s = w1 * fsc[:, None]
    a, b_, c_, d_ = w1s[0:H], w1s[H:2 * H], w1s[2 * H:3 * H], w1s[3 * H:4 * H]
    w1m = jnp.concatenate([a + c_, b_ - c_, d_], axis=0)          # (3H, d_mlp)
    b1f = fsh @ w1 + b1

    # BN after MLP layer 1 folded into MLP layer 2; BN after layer 2 folded into out.
    sc1, sh1 = bn_scale_shift(*bn1)
    w2, b2, bn2 = P["mlp"][1]
    w2f = w2 * sc1[:, None]
    b2f = sh1 @ w2 + b2
    sc2, sh2 = bn_scale_shift(*bn2)
    wof = P["out_w"] * sc2[:, None]
    bof = sh2 @ P["out_w"] + P["out_b"]

    f32 = lambda x: x.astype(jnp.float32)
    bf16 = lambda x: x.astype(jnp.bfloat16)
    return {
        "tbl": bf16(tbl), "whh": bf16(whh),
        "w1": f32(w1m), "b1": f32(b1f.reshape(1, -1)),
        "w2": f32(w2f), "b2": f32(b2f.reshape(1, -1)),
        "wo": f32(wof), "bo": f32(bof.reshape(1, -1)),
    }


# ---------------------------------------------------------------------------
# Pure-JAX reference of the ORIGINAL (unfolded, f32) forward, for correctness checking.
# ---------------------------------------------------------------------------

def snli_forward_ref(premise_ids, hypothesis_ids, P, cfg):
    S, B = premise_ids.shape
    d_embed, H = cfg["d_embed"], cfg["d_hidden"]

    def embed_and_project(ids):
        emb = jnp.take(P["embed"], ids, axis=0).reshape(S * B, d_embed)
        sc, sh = bn_scale_shift(*P["embed_bn"])
        out = (emb @ P["proj_w"] + P["proj_b"]) * sc + sh
        return out.reshape(S, B, cfg["d_proj"])

    def lstm_ref(x):
        h = jnp.zeros((B, H), jnp.float32)
        c = jnp.zeros((B, H), jnp.float32)
        for t in range(S):
            gates = x[t] @ P["lstm_wih"] + h @ P["lstm_whh"] + P["lstm_b"]
            i = jax.nn.sigmoid(gates[:, 0 * H:1 * H])
            f = jax.nn.sigmoid(gates[:, 1 * H:2 * H])
            g = jnp.tanh(gates[:, 2 * H:3 * H])
            o = jax.nn.sigmoid(gates[:, 3 * H:4 * H])
            c = f * c + i * g
            h = o * jnp.tanh(c)
        return h

    prem = lstm_ref(embed_and_project(premise_ids))
    hypo = lstm_ref(embed_and_project(hypothesis_ids))
    fsc, fsh = bn_scale_shift(*P["feat_bn"])
    x = jnp.concatenate([prem, hypo, prem - hypo, prem * hypo], axis=1) * fsc + fsh
    for (w, b, bnp) in P["mlp"]:
        sc, sh = bn_scale_shift(*bnp)
        x = jnp.maximum(x @ w + b, 0.0) * sc + sh
    return x @ P["out_w"] + P["out_b"]


# ---------------------------------------------------------------------------
# Main
# ---------------------------------------------------------------------------

if __name__ == "__main__":
    cfg = dict(n_embed=100, d_embed=32, d_proj=32, d_hidden=32,
               d_mlp=64, d_out=3, n_mlp_layers=2)
    S, B = 8, 4
    H = cfg["d_hidden"]

    key = jax.random.PRNGKey(0)
    keys = iter(jax.random.split(key, 64))

    def nrm(shape, s=0.1):
        return (s * jax.random.normal(next(keys), shape)).astype(jnp.float32)

    def bn_params(d):
        gamma = 1.0 + nrm((d,), 0.05)
        beta = nrm((d,), 0.05)
        mean = nrm((d,), 0.05)
        var = 1.0 + jnp.abs(nrm((d,), 0.05))
        return (gamma, beta, mean, var)

    P = {
        "embed": nrm((cfg["n_embed"], cfg["d_embed"]), 0.5),
        "proj_w": nrm((cfg["d_embed"], cfg["d_proj"])),
        "proj_b": nrm((cfg["d_proj"],)),
        "embed_bn": bn_params(cfg["d_proj"]),
        # LSTM weights stored pre-transposed: W_ih^T (D,4H), W_hh^T (H,4H); bias = b_ih+b_hh
        "lstm_wih": nrm((cfg["d_proj"], 4 * H)),
        "lstm_whh": nrm((H, 4 * H)),
        "lstm_b": nrm((4 * H,)),
        "feat_bn": bn_params(4 * H),
        "mlp": [
            (nrm((4 * H, cfg["d_mlp"])), nrm((cfg["d_mlp"],)), bn_params(cfg["d_mlp"])),
            (nrm((cfg["d_mlp"], cfg["d_mlp"])), nrm((cfg["d_mlp"],)), bn_params(cfg["d_mlp"])),
        ],
        "out_w": nrm((cfg["d_mlp"], cfg["d_out"])),
        "out_b": nrm((cfg["d_out"],)),
    }

    kp, kh = jax.random.split(jax.random.PRNGKey(1))
    premise_ids = jax.random.randint(kp, (S, B), 0, cfg["n_embed"], dtype=jnp.int32)
    hypothesis_ids = jax.random.randint(kh, (S, B), 0, cfg["n_embed"], dtype=jnp.int32)

    F = fold_params(P, cfg)                       # one-time weight prep (exact folds + bf16)
    scores = snli_forward(premise_ids, hypothesis_ids, F)
    scores = jax.block_until_ready(scores)

    ref = snli_forward_ref(premise_ids, hypothesis_ids, P, cfg)
    assert scores.shape == (B, cfg["d_out"])
    # bf16 MXU inputs (f32 accumulation) -> slightly looser tolerance than pure f32.
    assert jnp.allclose(scores, ref, atol=1e-2, rtol=1e-2), (scores, ref)

    print("KERNEL_OK")
</pallas_src>

<mosaic_0001>
module attributes {stable_mosaic.version = 11 : i64} {
  func.func @_snli_fused_kernel(%arg0: i32, %arg1: memref<64x1xi32, #tpu.memory_space<vmem>>, %arg2: memref<128x128xbf16, #tpu.memory_space<vmem>>, %arg3: memref<32x128xbf16, #tpu.memory_space<vmem>>, %arg4: memref<96x64xf32, #tpu.memory_space<vmem>>, %arg5: memref<1x64xf32, #tpu.memory_space<vmem>>, %arg6: memref<64x64xf32, #tpu.memory_space<vmem>>, %arg7: memref<1x64xf32, #tpu.memory_space<vmem>>, %arg8: memref<64x3xf32, #tpu.memory_space<vmem>>, %arg9: memref<1x3xf32, #tpu.memory_space<vmem>>, %arg10: memref<4x3xf32, #tpu.memory_space<vmem>>) attributes {dimension_semantics = [#tpu.dimension_semantics<parallel>], iteration_bounds = array<i64: 1>, scalar_prefetch = 0 : i64, scratch_operands = 0 : i64, tpu.core_type = #tpu.core_type<tc>, window_params = [{transform_indices = @transform_0, window_bounds = array<i64: 64, 1>}, {pipeline_mode = #tpu.pipeline_mode<synchronous>, transform_indices = @transform_1, window_bounds = array<i64: 128, 128>}, {pipeline_mode = #tpu.pipeline_mode<synchronous>, transform_indices = @transform_2, window_bounds = array<i64: 32, 128>}, {pipeline_mode = #tpu.pipeline_mode<synchronous>, transform_indices = @transform_3, window_bounds = array<i64: 96, 64>}, {pipeline_mode = #tpu.pipeline_mode<synchronous>, transform_indices = @transform_4, window_bounds = array<i64: 1, 64>}, {pipeline_mode = #tpu.pipeline_mode<synchronous>, transform_indices = @transform_5, window_bounds = array<i64: 64, 64>}, {pipeline_mode = #tpu.pipeline_mode<synchronous>, transform_indices = @transform_6, window_bounds = array<i64: 1, 64>}, {pipeline_mode = #tpu.pipeline_mode<synchronous>, transform_indices = @transform_7, window_bounds = array<i64: 64, 3>}, {pipeline_mode = #tpu.pipeline_mode<synchronous>, transform_indices = @transform_8, window_bounds = array<i64: 1, 3>}, {transform_indices = @transform_9, window_bounds = array<i64: 4, 3>}]} {
    %c0 = arith.constant 0 : index
    %c0_0 = arith.constant 0 : index
    %0 = vector.load %arg1[%c0, %c0_0] : memref<64x1xi32, #tpu.memory_space<vmem>>, vector<64x1xi32>
    %1 = tpu.iota {dimensions = array<i32: 1>} : vector<64x128xi32>
    %2 = vector.broadcast %0 : vector<64x1xi32> to vector<64x128xi32>
    %3 = arith.cmpi eq, %2, %1 : vector<64x128xi32>
    %4 = arith.extui %3 : vector<64x128xi1> to vector<64x128xi32>
    %5 = arith.sitofp %4 : vector<64x128xi32> to vector<64x128xf32>
    %6 = arith.truncf %5 : vector<64x128xf32> to vector<64x128xbf16>
    %c0_1 = arith.constant 0 : index
    %c0_2 = arith.constant 0 : index
    %7 = vector.load %arg2[%c0_1, %c0_2] : memref<128x128xbf16, #tpu.memory_space<vmem>>, vector<128x128xbf16>
    %cst = arith.constant dense<0.000000e+00> : vector<64x128xf32>
    %8 = tpu.matmul %6, %7, %cst {dimension_numbers = #tpu.dot_dimension_numbers<[1], [0], [0], [1], [0, 0, 1, 1], [], []>} : vector<64x128xbf16>, vector<128x128xbf16>, vector<64x128xf32> -> vector<64x128xf32>
    %c0_3 = arith.constant 0 : index
    %c0_4 = arith.constant 0 : index
    %9 = vector.load %arg3[%c0_3, %c0_4] : memref<32x128xbf16, #tpu.memory_space<vmem>>, vector<32x128xbf16>
    %cst_5 = arith.constant 0.000000e+00 : f32
    %10 = vector.broadcast %cst_5 : f32 to vector<8x32xf32>
    %cst_6 = arith.constant 0.000000e+00 : f32
    %11 = vector.broadcast %cst_6 : f32 to vector<8x32xf32>
    %12 = vector.extract_strided_slice %8 {offsets = [0, 0], sizes = [8, 128], strides = [1, 1]} : vector<64x128xf32> to vector<8x128xf32>
    %13 = arith.truncf %10 : vector<8x32xf32> to vector<8x32xbf16>
    %cst_7 = arith.constant dense<0.000000e+00> : vector<8x128xf32>
    %14 = tpu.matmul %13, %9, %cst_7 {dimension_numbers = #tpu.dot_dimension_numbers<[1], [0], [0], [1], [0, 0, 1, 1], [], []>} : vector<8x32xbf16>, vector<32x128xbf16>, vector<8x128xf32> -> vector<8x128xf32>
    %15 = arith.addf %12, %14 : vector<8x128xf32>
    %16 = vector.extract_strided_slice %15 {offsets = [0, 0], sizes = [8, 96], strides = [1, 1]} : vector<8x128xf32> to vector<8x96xf32>
    %17 = arith.negf %16 : vector<8x96xf32>
    %18 = math.exp %17 : vector<8x96xf32>
    %cst_8 = arith.constant 1.000000e+00 : f32
    %19 = vector.broadcast %cst_8 : f32 to vector<8x96xf32>
    %20 = arith.addf %19, %18 : vector<8x96xf32>
    %21 = arith.divf %19, %20 : vector<8x96xf32>
    %22 = vector.extract_strided_slice %15 {offsets = [0, 96], sizes = [8, 32], strides = [1, 1]} : vector<8x128xf32> to vector<8x32xf32>
    %23 = math.tanh %22 : vector<8x32xf32>
    %24 = vector.extract_strided_slice %21 {offsets = [0, 0], sizes = [8, 32], strides = [1, 1]} : vector<8x96xf32> to vector<8x32xf32>
    %25 = vector.extract_strided_slice %21 {offsets = [0, 32], sizes = [8, 32], strides = [1, 1]} : vector<8x96xf32> to vector<8x32xf32>
    %26 = vector.extract_strided_slice %21 {offsets = [0, 64], sizes = [8, 32], strides = [1, 1]} : vector<8x96xf32> to vector<8x32xf32>
    %27 = arith.mulf %25, %11 : vector<8x32xf32>
    %28 = arith.mulf %24, %23 : vector<8x32xf32>
    %29 = arith.addf %27, %28 : vector<8x32xf32>
    %30 = math.tanh %29 : vector<8x32xf32>
    %31 = arith.mulf %26, %30 : vector<8x32xf32>
    %32 = vector.extract_strided_slice %8 {offsets = [8, 0], sizes = [8, 128], strides = [1, 1]} : vector<64x128xf32> to vector<8x128xf32>
    %33 = arith.truncf %31 : vector<8x32xf32> to vector<8x32xbf16>
    %cst_9 = arith.constant dense<0.000000e+00> : vector<8x128xf32>
    %34 = tpu.matmul %33, %9, %cst_9 {dimension_numbers = #tpu.dot_dimension_numbers<[1], [0], [0], [1], [0, 0, 1, 1], [], []>} : vector<8x32xbf16>, vector<32x128xbf16>, vector<8x128xf32> -> vector<8x128xf32>
    %35 = arith.addf %32, %34 : vector<8x128xf32>
    %36 = vector.extract_strided_slice %35 {offsets = [0, 0], sizes = [8, 96], strides = [1, 1]} : vector<8x128xf32> to vector<8x96xf32>
    %37 = arith.negf %36 : vector<8x96xf32>
    %38 = math.exp %37 : vector<8x96xf32>
    %cst_10 = arith.constant 1.000000e+00 : f32
    %39 = vector.broadcast %cst_10 : f32 to vector<8x96xf32>
    %40 = arith.addf %39, %38 : vector<8x96xf32>
    %41 = arith.divf %39, %40 : vector<8x96xf32>
    %42 = vector.extract_strided_slice %35 {offsets = [0, 96], sizes = [8, 32], strides = [1, 1]} : vector<8x128xf32> to vector<8x32xf32>
    %43 = math.tanh %42 : vector<8x32xf32>
    %44 = vector.extract_strided_slice %41 {offsets = [0, 0], sizes = [8, 32], strides = [1, 1]} : vector<8x96xf32> to vector<8x32xf32>
    %45 = vector.extract_strided_slice %41 {offsets = [0, 32], sizes = [8, 32], strides = [1, 1]} : vector<8x96xf32> to vector<8x32xf32>
    %46 = vector.extract_strided_slice %41 {offsets = [0, 64], sizes = [8, 32], strides = [1, 1]} : vector<8x96xf32> to vector<8x32xf32>
    %47 = arith.mulf %45, %29 : vector<8x32xf32>
    %48 = arith.mulf %44, %43 : vector<8x32xf32>
    %49 = arith.addf %47, %48 : vector<8x32xf32>
    %50 = math.tanh %49 : vector<8x32xf32>
    %51 = arith.mulf %46, %50 : vector<8x32xf32>
    %52 = vector.extract_strided_slice %8 {offsets = [16, 0], sizes = [8, 128], strides = [1, 1]} : vector<64x128xf32> to vector<8x128xf32>
    %53 = arith.truncf %51 : vector<8x32xf32> to vector<8x32xbf16>
    %cst_11 = arith.constant dense<0.000000e+00> : vector<8x128xf32>
    %54 = tpu.matmul %53, %9, %cst_11 {dimension_numbers = #tpu.dot_dimension_numbers<[1], [0], [0], [1], [0, 0, 1, 1], [], []>} : vector<8x32xbf16>, vector<32x128xbf16>, vector<8x128xf32> -> vector<8x128xf32>
    %55 = arith.addf %52, %54 : vector<8x128xf32>
    %56 = vector.extract_strided_slice %55 {offsets = [0, 0], sizes = [8, 96], strides = [1, 1]} : vector<8x128xf32> to vector<8x96xf32>
    %57 = arith.negf %56 : vector<8x96xf32>
    %58 = math.exp %57 : vector<8x96xf32>
    %cst_12 = arith.constant 1.000000e+00 : f32
    %59 = vector.broadcast %cst_12 : f32 to vector<8x96xf32>
    %60 = arith.addf %59, %58 : vector<8x96xf32>
    %61 = arith.divf %59, %60 : vector<8x96xf32>
    %62 = vector.extract_strided_slice %55 {offsets = [0, 96], sizes = [8, 32], strides = [1, 1]} : vector<8x128xf32> to vector<8x32xf32>
    %63 = math.tanh %62 : vector<8x32xf32>
    %64 = vector.extract_strided_slice %61 {offsets = [0, 0], sizes = [8, 32], strides = [1, 1]} : vector<8x96xf32> to vector<8x32xf32>
    %65 = vector.extract_strided_slice %61 {offsets = [0, 32], sizes = [8, 32], strides = [1, 1]} : vector<8x96xf32> to vector<8x32xf32>
    %66 = vector.extract_strided_slice %61 {offsets = [0, 64], sizes = [8, 32], strides = [1, 1]} : vector<8x96xf32> to vector<8x32xf32>
    %67 = arith.mulf %65, %49 : vector<8x32xf32>
    %68 = arith.mulf %64, %63 : vector<8x32xf32>
    %69 = arith.addf %67, %68 : vector<8x32xf32>
    %70 = math.tanh %69 : vector<8x32xf32>
    %71 = arith.mulf %66, %70 : vector<8x32xf32>
    %72 = vector.extract_strided_slice %8 {offsets = [24, 0], sizes = [8, 128], strides = [1, 1]} : vector<64x128xf32> to vector<8x128xf32>
    %73 = arith.truncf %71 : vector<8x32xf32> to vector<8x32xbf16>
    %cst_13 = arith.constant dense<0.000000e+00> : vector<8x128xf32>
    %74 = tpu.matmul %73, %9, %cst_13 {dimension_numbers = #tpu.dot_dimension_numbers<[1], [0], [0], [1], [0, 0, 1, 1], [], []>} : vector<8x32xbf16>, vector<32x128xbf16>, vector<8x128xf32> -> vector<8x128xf32>
    %75 = arith.addf %72, %74 : vector<8x128xf32>
    %76 = vector.extract_strided_slice %75 {offsets = [0, 0], sizes = [8, 96], strides = [1, 1]} : vector<8x128xf32> to vector<8x96xf32>
    %77 = arith.negf %76 : vector<8x96xf32>
    %78 = math.exp %77 : vector<8x96xf32>
    %cst_14 = arith.constant 1.000000e+00 : f32
    %79 = vector.broadcast %cst_14 : f32 to vector<8x96xf32>
    %80 = arith.addf %79, %78 : vector<8x96xf32>
    %81 = arith.divf %79, %80 : vector<8x96xf32>
    %82 = vector.extract_strided_slice %75 {offsets = [0, 96], sizes = [8, 32], strides = [1, 1]} : vector<8x128xf32> to vector<8x32xf32>
    %83 = math.tanh %82 : vector<8x32xf32>
    %84 = vector.extract_strided_slice %81 {offsets = [0, 0], sizes = [8, 32], strides = [1, 1]} : vector<8x96xf32> to vector<8x32xf32>
    %85 = vector.extract_strided_slice %81 {offsets = [0, 32], sizes = [8, 32], strides = [1, 1]} : vector<8x96xf32> to vector<8x32xf32>
    %86 = vector.extract_strided_slice %81 {offsets = [0, 64], sizes = [8, 32], strides = [1, 1]} : vector<8x96xf32> to vector<8x32xf32>
    %87 = arith.mulf %85, %69 : vector<8x32xf32>
    %88 = arith.mulf %84, %83 : vector<8x32xf32>
    %89 = arith.addf %87, %88 : vector<8x32xf32>
    %90 = math.tanh %89 : vector<8x32xf32>
    %91 = arith.mulf %86, %90 : vector<8x32xf32>
    %92 = vector.extract_strided_slice %8 {offsets = [32, 0], sizes = [8, 128], strides = [1, 1]} : vector<64x128xf32> to vector<8x128xf32>
    %93 = arith.truncf %91 : vector<8x32xf32> to vector<8x32xbf16>
    %cst_15 = arith.constant dense<0.000000e+00> : vector<8x128xf32>
    %94 = tpu.matmul %93, %9, %cst_15 {dimension_numbers = #tpu.dot_dimension_numbers<[1], [0], [0], [1], [0, 0, 1, 1], [], []>} : vector<8x32xbf16>, vector<32x128xbf16>, vector<8x128xf32> -> vector<8x128xf32>
    %95 = arith.addf %92, %94 : vector<8x128xf32>
    %96 = vector.extract_strided_slice %95 {offsets = [0, 0], sizes = [8, 96], strides = [1, 1]} : vector<8x128xf32> to vector<8x96xf32>
    %97 = arith.negf %96 : vector<8x96xf32>
    %98 = math.exp %97 : vector<8x96xf32>
    %cst_16 = arith.constant 1.000000e+00 : f32
    %99 = vector.broadcast %cst_16 : f32 to vector<8x96xf32>
    %100 = arith.addf %99, %98 : vector<8x96xf32>
    %101 = arith.divf %99, %100 : vector<8x96xf32>
    %102 = vector.extract_strided_slice %95 {offsets = [0, 96], sizes = [8, 32], strides = [1, 1]} : vector<8x128xf32> to vector<8x32xf32>
    %103 = math.tanh %102 : vector<8x32xf32>
    %104 = vector.extract_strided_slice %101 {offsets = [0, 0], sizes = [8, 32], strides = [1, 1]} : vector<8x96xf32> to vector<8x32xf32>
    %105 = vector.extract_strided_slice %101 {offsets = [0, 32], sizes = [8, 32], strides = [1, 1]} : vector<8x96xf32> to vector<8x32xf32>
    %106 = vector.extract_strided_slice %101 {offsets = [0, 64], sizes = [8, 32], strides = [1, 1]} : vector<8x96xf32> to vector<8x32xf32>
    %107 = arith.mulf %105, %89 : vector<8x32xf32>
    %108 = arith.mulf %104, %103 : vector<8x32xf32>
    %109 = arith.addf %107, %108 : vector<8x32xf32>
    %110 = math.tanh %109 : vector<8x32xf32>
    %111 = arith.mulf %106, %110 : vector<8x32xf32>
    %112 = vector.extract_strided_slice %8 {offsets = [40, 0], sizes = [8, 128], strides = [1, 1]} : vector<64x128xf32> to vector<8x128xf32>
    %113 = arith.truncf %111 : vector<8x32xf32> to vector<8x32xbf16>
    %cst_17 = arith.constant dense<0.000000e+00> : vector<8x128xf32>
    %114 = tpu.matmul %113, %9, %cst_17 {dimension_numbers = #tpu.dot_dimension_numbers<[1], [0], [0], [1], [0, 0, 1, 1], [], []>} : vector<8x32xbf16>, vector<32x128xbf16>, vector<8x128xf32> -> vector<8x128xf32>
    %115 = arith.addf %112, %114 : vector<8x128xf32>
    %116 = vector.extract_strided_slice %115 {offsets = [0, 0], sizes = [8, 96], strides = [1, 1]} : vector<8x128xf32> to vector<8x96xf32>
    %117 = arith.negf %116 : vector<8x96xf32>
    %118 = math.exp %117 : vector<8x96xf32>
    %cst_18 = arith.constant 1.000000e+00 : f32
    %119 = vector.broadcast %cst_18 : f32 to vector<8x96xf32>
    %120 = arith.addf %119, %118 : vector<8x96xf32>
    %121 = arith.divf %119, %120 : vector<8x96xf32>
    %122 = vector.extract_strided_slice %115 {offsets = [0, 96], sizes = [8, 32], strides = [1, 1]} : vector<8x128xf32> to vector<8x32xf32>
    %123 = math.tanh %122 : vector<8x32xf32>
    %124 = vector.extract_strided_slice %121 {offsets = [0, 0], sizes = [8, 32], strides = [1, 1]} : vector<8x96xf32> to vector<8x32xf32>
    %125 = vector.extract_strided_slice %121 {offsets = [0, 32], sizes = [8, 32], strides = [1, 1]} : vector<8x96xf32> to vector<8x32xf32>
    %126 = vector.extract_strided_slice %121 {offsets = [0, 64], sizes = [8, 32], strides = [1, 1]} : vector<8x96xf32> to vector<8x32xf32>
    %127 = arith.mulf %125, %109 : vector<8x32xf32>
    %128 = arith.mulf %124, %123 : vector<8x32xf32>
    %129 = arith.addf %127, %128 : vector<8x32xf32>
    %130 = math.tanh %129 : vector<8x32xf32>
    %131 = arith.mulf %126, %130 : vector<8x32xf32>
    %132 = vector.extract_strided_slice %8 {offsets = [48, 0], sizes = [8, 128], strides = [1, 1]} : vector<64x128xf32> to vector<8x128xf32>
    %133 = arith.truncf %131 : vector<8x32xf32> to vector<8x32xbf16>
    %cst_19 = arith.constant dense<0.000000e+00> : vector<8x128xf32>
    %134 = tpu.matmul %133, %9, %cst_19 {dimension_numbers = #tpu.dot_dimension_numbers<[1], [0], [0], [1], [0, 0, 1, 1], [], []>} : vector<8x32xbf16>, vector<32x128xbf16>, vector<8x128xf32> -> vector<8x128xf32>
    %135 = arith.addf %132, %134 : vector<8x128xf32>
    %136 = vector.extract_strided_slice %135 {offsets = [0, 0], sizes = [8, 96], strides = [1, 1]} : vector<8x128xf32> to vector<8x96xf32>
    %137 = arith.negf %136 : vector<8x96xf32>
    %138 = math.exp %137 : vector<8x96xf32>
    %cst_20 = arith.constant 1.000000e+00 : f32
    %139 = vector.broadcast %cst_20 : f32 to vector<8x96xf32>
    %140 = arith.addf %139, %138 : vector<8x96xf32>
    %141 = arith.divf %139, %140 : vector<8x96xf32>
    %142 = vector.extract_strided_slice %135 {offsets = [0, 96], sizes = [8, 32], strides = [1, 1]} : vector<8x128xf32> to vector<8x32xf32>
    %143 = math.tanh %142 : vector<8x32xf32>
    %144 = vector.extract_strided_slice %141 {offsets = [0, 0], sizes = [8, 32], strides = [1, 1]} : vector<8x96xf32> to vector<8x32xf32>
    %145 = vector.extract_strided_slice %141 {offsets = [0, 32], sizes = [8, 32], strides = [1, 1]} : vector<8x96xf32> to vector<8x32xf32>
    %146 = vector.extract_strided_slice %141 {offsets = [0, 64], sizes = [8, 32], strides = [1, 1]} : vector<8x96xf32> to vector<8x32xf32>
    %147 = arith.mulf %145, %129 : vector<8x32xf32>
    %148 = arith.mulf %144, %143 : vector<8x32xf32>
    %149 = arith.addf %147, %148 : vector<8x32xf32>
    %150 = math.tanh %149 : vector<8x32xf32>
    %151 = arith.mulf %146, %150 : vector<8x32xf32>
    %152 = vector.extract_strided_slice %8 {offsets = [56, 0], sizes = [8, 128], strides = [1, 1]} : vector<64x128xf32> to vector<8x128xf32>
    %153 = arith.truncf %151 : vector<8x32xf32> to vector<8x32xbf16>
    %cst_21 = arith.constant dense<0.000000e+00> : vector<8x128xf32>
    %154 = tpu.matmul %153, %9, %cst_21 {dimension_numbers = #tpu.dot_dimension_numbers<[1], [0], [0], [1], [0, 0, 1, 1], [], []>} : vector<8x32xbf16>, vector<32x128xbf16>, vector<8x128xf32> -> vector<8x128xf32>
    %155 = arith.addf %152, %154 : vector<8x128xf32>
    %156 = vector.extract_strided_slice %155 {offsets = [0, 0], sizes = [8, 96], strides = [1, 1]} : vector<8x128xf32> to vector<8x96xf32>
    %157 = arith.negf %156 : vector<8x96xf32>
    %158 = math.exp %157 : vector<8x96xf32>
    %cst_22 = arith.constant 1.000000e+00 : f32
    %159 = vector.broadcast %cst_22 : f32 to vector<8x96xf32>
    %160 = arith.addf %159, %158 : vector<8x96xf32>
    %161 = arith.divf %159, %160 : vector<8x96xf32>
    %162 = vector.extract_strided_slice %155 {offsets = [0, 96], sizes = [8, 32], strides = [1, 1]} : vector<8x128xf32> to vector<8x32xf32>
    %163 = math.tanh %162 : vector<8x32xf32>
    %164 = vector.extract_strided_slice %161 {offsets = [0, 0], sizes = [8, 32], strides = [1, 1]} : vector<8x96xf32> to vector<8x32xf32>
    %165 = vector.extract_strided_slice %161 {offsets = [0, 32], sizes = [8, 32], strides = [1, 1]} : vector<8x96xf32> to vector<8x32xf32>
    %166 = vector.extract_strided_slice %161 {offsets = [0, 64], sizes = [8, 32], strides = [1, 1]} : vector<8x96xf32> to vector<8x32xf32>
    %167 = arith.mulf %165, %149 : vector<8x32xf32>
    %168 = arith.mulf %164, %163 : vector<8x32xf32>
    %169 = arith.addf %167, %168 : vector<8x32xf32>
    %170 = math.tanh %169 : vector<8x32xf32>
    %171 = arith.mulf %166, %170 : vector<8x32xf32>
    %172 = vector.extract_strided_slice %171 {offsets = [0, 0], sizes = [4, 32], strides = [1, 1]} : vector<8x32xf32> to vector<4x32xf32>
    %173 = vector.extract_strided_slice %171 {offsets = [4, 0], sizes = [4, 32], strides = [1, 1]} : vector<8x32xf32> to vector<4x32xf32>
    %174 = arith.mulf %172, %173 : vector<4x32xf32>
    %175 = tpu.concatenate %172, %173, %174 in 1 : vector<4x32xf32>, vector<4x32xf32>, vector<4x32xf32> -> vector<4x96xf32>
    %c0_23 = arith.constant 0 : index
    %c0_24 = arith.constant 0 : index
    %176 = vector.load %arg4[%c0_23, %c0_24] : memref<96x64xf32, #tpu.memory_space<vmem>>, vector<96x64xf32>
    %cst_25 = arith.constant dense<0.000000e+00> : vector<4x64xf32>
    %177 = tpu.matmul %175, %176, %cst_25 {dimension_numbers = #tpu.dot_dimension_numbers<[1], [0], [0], [1], [0, 0, 1, 1], [], []>} : vector<4x96xf32>, vector<96x64xf32>, vector<4x64xf32> -> vector<4x64xf32>
    %c0_26 = arith.constant 0 : index
    %c0_27 = arith.constant 0 : index
    %178 = vector.load %arg5[%c0_26, %c0_27] : memref<1x64xf32, #tpu.memory_space<vmem>>, vector<1x64xf32>
    %179 = vector.broadcast %178 : vector<1x64xf32> to vector<4x64xf32>
    %180 = arith.addf %177, %179 : vector<4x64xf32>
    %cst_28 = arith.constant 0.000000e+00 : f32
    %181 = vector.broadcast %cst_28 : f32 to vector<4x64xf32>
    %182 = arith.maximumf %180, %181 : vector<4x64xf32>
    %c0_29 = arith.constant 0 : index
    %c0_30 = arith.constant 0 : index
    %183 = vector.load %arg6[%c0_29, %c0_30] : memref<64x64xf32, #tpu.memory_space<vmem>>, vector<64x64xf32>
    %cst_31 = arith.constant dense<0.000000e+00> : vector<4x64xf32>
    %184 = tpu.matmul %182, %183, %cst_31 {dimension_numbers = #tpu.dot_dimension_numbers<[1], [0], [0], [1], [0, 0, 1, 1], [], []>} : vector<4x64xf32>, vector<64x64xf32>, vector<4x64xf32> -> vector<4x64xf32>
    %c0_32 = arith.constant 0 : index
    %c0_33 = arith.constant 0 : index
    %185 = vector.load %arg7[%c0_32, %c0_33] : memref<1x64xf32, #tpu.memory_space<vmem>>, vector<1x64xf32>
    %186 = vector.broadcast %185 : vector<1x64xf32> to vector<4x64xf32>
    %187 = arith.addf %184, %186 : vector<4x64xf32>
    %cst_34 = arith.constant 0.000000e+00 : f32
    %188 = vector.broadcast %cst_34 : f32 to vector<4x64xf32>
    %189 = arith.maximumf %187, %188 : vector<4x64xf32>
    %c0_35 = arith.constant 0 : index
    %c0_36 = arith.constant 0 : index
    %190 = vector.load %arg8[%c0_35, %c0_36] : memref<64x3xf32, #tpu.memory_space<vmem>>, vector<64x3xf32>
    %cst_37 = arith.constant dense<0.000000e+00> : vector<4x3xf32>
    %191 = tpu.matmul %189, %190, %cst_37 {dimension_numbers = #tpu.dot_dimension_numbers<[1], [0], [0], [1], [0, 0, 1, 1], [], []>} : vector<4x64xf32>, vector<64x3xf32>, vector<4x3xf32> -> vector<4x3xf32>
    %c0_38 = arith.constant 0 : index
    %c0_39 = arith.constant 0 : index
    %192 = vector.load %arg9[%c0_38, %c0_39] : memref<1x3xf32, #tpu.memory_space<vmem>>, vector<1x3xf32>
    %193 = vector.broadcast %192 : vector<1x3xf32> to vector<4x3xf32>
    %194 = arith.addf %191, %193 : vector<4x3xf32>
    %c0_40 = arith.constant 0 : index
    %c0_41 = arith.constant 0 : index
    %195 = vector.load %arg10[%c0_40, %c0_41] : memref<4x3xf32, #tpu.memory_space<vmem>>, vector<4x3xf32>
    tpu.vector_store %arg10[%c0_40, %c0_41], %194 {strides = array<i32>} : memref<4x3xf32, #tpu.memory_space<vmem>>, vector<4x3xf32>,
    return
  }
  func.func @transform_0(%arg0: i32) -> (i32, i32) {
    %c0_i32 = arith.constant 0 : i32
    %c0_i32_0 = arith.constant 0 : i32
    return %arg0, %c0_i32 : i32, i32
  }
  func.func @transform_1(%arg0: i32) -> (i32, i32) {
    %c0_i32 = arith.constant 0 : i32
    %c0_i32_0 = arith.constant 0 : i32
    %c0_i32_1 = arith.constant 0 : i32
    return %c0_i32, %c0_i32_0 : i32, i32
  }
  func.func @transform_2(%arg0: i32) -> (i32, i32) {
    %c0_i32 = arith.constant 0 : i32
    %c0_i32_0 = arith.constant 0 : i32
    %c0_i32_1 = arith.constant 0 : i32
    return %c0_i32, %c0_i32_0 : i32, i32
  }
  func.func @transform_3(%arg0: i32) -> (i32, i32) {
    %c0_i32 = arith.constant 0 : i32
    %c0_i32_0 = arith.constant 0 : i32
    %c0_i32_1 = arith.constant 0 : i32
    return %c0_i32, %c0_i32_0 : i32, i32
  }
  func.func @transform_4(%arg0: i32) -> (i32, i32) {
    %c0_i32 = arith.constant 0 : i32
    %c0_i32_0 = arith.constant 0 : i32
    %c0_i32_1 = arith.constant 0 : i32
    return %c0_i32, %c0_i32_0 : i32, i32
  }
  func.func @transform_5(%arg0: i32) -> (i32, i32) {
    %c0_i32 = arith.constant 0 : i32
    %c0_i32_0 = arith.constant 0 : i32
    %c0_i32_1 = arith.constant 0 : i32
    return %c0_i32, %c0_i32_0 : i32, i32
  }
  func.func @transform_6(%arg0: i32) -> (i32, i32) {
    %c0_i32 = arith.constant 0 : i32
    %c0_i32_0 = arith.constant 0 : i32
    %c0_i32_1 = arith.constant 0 : i32
    return %c0_i32, %c0_i32_0 : i32, i32
  }
  func.func @transform_7(%arg0: i32) -> (i32, i32) {
    %c0_i32 = arith.constant 0 : i32
    %c0_i32_0 = arith.constant 0 : i32
    %c0_i32_1 = arith.constant 0 : i32
    return %c0_i32, %c0_i32_0 : i32, i32
  }
  func.func @transform_8(%arg0: i32) -> (i32, i32) {
    %c0_i32 = arith.constant 0 : i32
    %c0_i32_0 = arith.constant 0 : i32
    %c0_i32_1 = arith.constant 0 : i32
    return %c0_i32, %c0_i32_0 : i32, i32
  }
  func.func @transform_9(%arg0: i32) -> (i32, i32) {
    %c0_i32 = arith.constant 0 : i32
    %c0_i32_0 = arith.constant 0 : i32
    return %arg0, %c0_i32 : i32, i32
  }
}

</mosaic_0001>

<llo_original>
// kernel: snli_forward.1
$region0: #{snli_forward.1}
  #allocation0 [shape = 'u32[]', space=smem, size = 0x4, offset = 0x4, fixed_abs, tag = 'smem constant byte address 0x4 - core index']
  #allocation1 [shape = 'u32[144,128]{1,0:T(1,128)}', space=vmem, size = 0x12000, scoped, tag = 'internal scratch']
  %s0 = inlined_call_operand.vmem [shape: s32[64,1], index: 0, kind: input, shape index: {}]
  %s1 = inlined_call_operand.vmem [shape: bf16[128,128], index: 1, kind: input, shape index: {}]
  %s2 = inlined_call_operand.vmem [shape: bf16[32,128], index: 2, kind: input, shape index: {}]
  %s3 = inlined_call_operand.vmem [shape: f32[96,64], index: 3, kind: input, shape index: {}]
  %s4 = inlined_call_operand.vmem [shape: f32[1,64], index: 4, kind: input, shape index: {}]
  %s5 = inlined_call_operand.vmem [shape: f32[64,64], index: 5, kind: input, shape index: {}]
  %s6 = inlined_call_operand.vmem [shape: f32[1,64], index: 6, kind: input, shape index: {}]
  %s7 = inlined_call_operand.vmem [shape: f32[64,3], index: 7, kind: input, shape index: {}]
  %s8 = inlined_call_operand.vmem [shape: f32[1,3], index: 8, kind: input, shape index: {}]
  %s9 = inlined_call_operand.hbm [shape: f32[4,3], index: 9, kind: output, shape index: {}]
  %s10 = sld [smem:[#allocation0]]
  $region46: #{snli_forward.1} parent=0
    _
  %s12 = ssub.s32 1, %s10
  %s13 = scalar_select 0, %s12, %s10
  $region1: #{snli_forward.1} parent=0
    #allocation2 [shape = 'u8[2048]{0}', space=vmem, size = 0x800, scoped, tag = 'output window, operand 0, single buffered']
    #allocation3 [shape = 's32[1]{0}', space=sflag, size = 0x4, scoped, tag = 'scoped memory for snli_forward.1']
    %14 = vsyncpa [#allocation3], 0
    // Predicated region
    $region2: #{snli_forward.1} parent=1 // pred_check
      _
    $region3: #{snli_forward.1} parent=1 // pred_check_branch
      %16 = sbr.rel (0) target = $region5
    $region4: #{snli_forward.1} parent=1 // pred_region
      _
    $region5: #{snli_forward.1} parent=1 // pred_fallthru
      _
    // Predicated region
    $region6: #{snli_forward.1} parent=1 // pred_check
      _
    $region7: #{snli_forward.1} parent=1 // pred_check_branch
      %18 = sbr.rel (0) target = $region9
    $region8: #{snli_forward.1} parent=1 // pred_region
      _
    $region9: #{snli_forward.1} parent=1 // pred_fallthru
      _
    // Predicated region
    $region10: #{snli_forward.1} parent=1 // pred_check
      _
    $region11: #{snli_forward.1} parent=1 // pred_check_branch
      %20 = sbr.rel (0) target = $region13
    $region12: #{snli_forward.1} parent=1 // pred_region
      _
    $region13: #{snli_forward.1} parent=1 // pred_fallthru
      _
    // Predicated region
    $region14: #{snli_forward.1} parent=1 // pred_check
      _
    $region15: #{snli_forward.1} parent=1 // pred_check_branch
      %22 = sbr.rel (0) target = $region17
    $region16: #{snli_forward.1} parent=1 // pred_region
      _
    $region17: #{snli_forward.1} parent=1 // pred_fallthru
      _
    // Predicated region
    $region18: #{snli_forward.1} parent=1 // pred_check
      _
    $region19: #{snli_forward.1} parent=1 // pred_check_branch
      %24 = sbr.rel (0) target = $region21
    $region20: #{snli_forward.1} parent=1 // pred_region
      _
    $region21: #{snli_forward.1} parent=1 // pred_fallthru
      _
    // Predicated region
    $region22: #{snli_forward.1} parent=1 // pred_check
      _
    $region23: #{snli_forward.1} parent=1 // pred_check_branch
      %26 = sbr.rel (0) target = $region25
    $region24: #{snli_forward.1} parent=1 // pred_region
      _
    $region25: #{snli_forward.1} parent=1 // pred_fallthru
      _
    // Predicated region
    $region26: #{snli_forward.1} parent=1 // pred_check
      _
    $region27: #{snli_forward.1} parent=1 // pred_check_branch
      %28 = sbr.rel (0) target = $region29
    $region28: #{snli_forward.1} parent=1 // pred_region
      _
    $region29: #{snli_forward.1} parent=1 // pred_fallthru
      _
    // Predicated region
    $region30: #{snli_forward.1} parent=1 // pred_check
      _
    $region31: #{snli_forward.1} parent=1 // pred_check_branch
      %30 = sbr.rel (0) target = $region33
    $region32: #{snli_forward.1} parent=1 // pred_region
      _
    $region33: #{snli_forward.1} parent=1 // pred_fallthru
      _
    // Predicated region
    $region34: #{snli_forward.1} parent=1 // pred_check
      _
    $region35: #{snli_forward.1} parent=1 // pred_check_branch
      %32 = sbr.rel (0) target = $region37
    $region36: #{snli_forward.1} parent=1 // pred_region
      _
    $region37: #{snli_forward.1} parent=1 // pred_fallthru
      _
    %v34 = vld [vmem:[%s0] sm:$0xff]
    %v35 = vld [vmem:[%s0 + $0x8] sm:$0xff]
    %v36 = vld [vmem:[%s0 + $0x10] sm:$0xff]
    %v37 = vld [vmem:[%s0 + $0x18] sm:$0xff]
    %v38 = vld [vmem:[%s0 + $0x20] sm:$0xff]
    %v39 = vld [vmem:[%s0 + $0x28] sm:$0xff]
    %v40 = vld [vmem:[%s0 + $0x30] sm:$0xff]
    %v41 = vld [vmem:[%s0 + $0x38] sm:$0xff]
    %v42 = vlaneseq
    %v43 = vand.u32 %v42, 127
    %44 = vset.pattern.permute.xlu0 0
    %45 = vperm.xlu0 %44, %v34
    %v46 = vpop.permute.xlu0 %45
    %47 = vset.pattern.permute.xlu0 0
    %48 = vperm.xlu0 %47, %v35
    %v49 = vpop.permute.xlu0 %48
    %50 = vset.pattern.permute.xlu0 0
    %51 = vperm.xlu0 %50, %v36
    %v52 = vpop.permute.xlu0 %51
    %53 = vset.pattern.permute.xlu0 0
    %54 = vperm.xlu0 %53, %v37
    %v55 = vpop.permute.xlu0 %54
    %56 = vset.pattern.permute.xlu0 0
    %57 = vperm.xlu0 %56, %v38
    %v58 = vpop.permute.xlu0 %57
    %59 = vset.pattern.permute.xlu0 0
    %60 = vperm.xlu0 %59, %v39
    %v61 = vpop.permute.xlu0 %60
    %62 = vset.pattern.permute.xlu0 0
    %63 = vperm.xlu0 %62, %v40
    %v64 = vpop.permute.xlu0 %63
    %65 = vset.pattern.permute.xlu0 0
    %66 = vperm.xlu0 %65, %v41
    %v67 = vpop.permute.xlu0 %66
    %vm68 = vcmp.eq.s32.totalorder %v46, %v43
    %vm69 = vcmp.eq.s32.totalorder %v49, %v43
    %vm70 = vcmp.eq.s32.totalorder %v52, %v43
    %vm71 = vcmp.eq.s32.totalorder %v55, %v43
    %vm72 = vcmp.eq.s32.totalorder %v58, %v43
    %vm73 = vcmp.eq.s32.totalorder %v61, %v43
    %vm74 = vcmp.eq.s32.totalorder %v64, %v43
    %vm75 = vcmp.eq.s32.totalorder %v67, %v43
    %v76 = vsel %vm68, 1, 0
    %v77 = vsel %vm69, 1, 0
    %v78 = vsel %vm70, 1, 0
    %v79 = vsel %vm71, 1, 0
    %v80 = vsel %vm72, 1, 0
    %v81 = vsel %vm73, 1, 0
    %v82 = vsel %vm74, 1, 0
    %v83 = vsel %vm75, 1, 0
    %v84 = vcvt.s32.f32 %v76
    %v85 = vcvt.s32.f32 %v77
    %v86 = vcvt.s32.f32 %v78
    %v87 = vcvt.s32.f32 %v79
    %v88 = vcvt.s32.f32 %v80
    %v89 = vcvt.s32.f32 %v81
    %v90 = vcvt.s32.f32 %v82
    %v91 = vcvt.s32.f32 %v83
    %v92 = vpack.c.bf16 %v85, %v84
    %v93 = vpack.c.bf16 %v87, %v86
    %v94 = vpack.c.bf16 %v89, %v88
    %v95 = vpack.c.bf16 %v91, %v90
    %v96 = vld [vmem:[%s1] sm:$0xf]
    %v97 = vld [vmem:[%s1 + $0x4] sm:$0xf]
    %v98 = vld [vmem:[%s1 + $0x8] sm:$0xf]
    %v99 = vld [vmem:[%s1 + $0xc] sm:$0xf]
    %v100 = vld [vmem:[%s1 + $0x10] sm:$0xf]
    %v101 = vld [vmem:[%s1 + $0x14] sm:$0xf]
    %v102 = vld [vmem:[%s1 + $0x18] sm:$0xf]
    %v103 = vld [vmem:[%s1 + $0x1c] sm:$0xf]
    %v104 = vld [vmem:[%s1 + $0x20] sm:$0xf]
    %v105 = vld [vmem:[%s1 + $0x24] sm:$0xf]
    %v106 = vld [vmem:[%s1 + $0x28] sm:$0xf]
    %v107 = vld [vmem:[%s1 + $0x2c] sm:$0xf]
    %v108 = vld [vmem:[%s1 + $0x30] sm:$0xf]
    %v109 = vld [vmem:[%s1 + $0x34] sm:$0xf]
    %v110 = vld [vmem:[%s1 + $0x38] sm:$0xf]
    %v111 = vld [vmem:[%s1 + $0x3c] sm:$0xf]
    %v128 = vunpack.c.l.b16 %v96
    %v129 = vunpack.c.l.b16 %v97
    %v130 = vunpack.c.l.b16 %v98
    %v131 = vunpack.c.l.b16 %v99
    %v132 = vunpack.c.l.b16 %v100
    %v133 = vunpack.c.l.b16 %v101
    %v134 = vunpack.c.l.b16 %v102
    %v135 = vunpack.c.l.b16 %v103
    %v136 = vunpack.c.l.b16 %v104
    %v137 = vunpack.c.l.b16 %v105
    %v138 = vunpack.c.l.b16 %v106
    %v139 = vunpack.c.l.b16 %v107
    %v140 = vunpack.c.l.b16 %v108
    %v141 = vunpack.c.l.b16 %v109
    %v142 = vunpack.c.l.b16 %v110
    %v143 = vunpack.c.l.b16 %v111
    %v144 = vpack.c.b16 %v129, %v128
    %v145 = vpack.c.b16 %v131, %v130
    %v146 = vpack.c.b16 %v133, %v132
    %v147 = vpack.c.b16 %v135, %v134
    %v148 = vpack.c.b16 %v137, %v136
    %v149 = vpack.c.b16 %v139, %v138
    %v150 = vpack.c.b16 %v141, %v140
    %v151 = vpack.c.b16 %v143, %v142
    %160 = vmatprep.subr.bf16.mxu0 0
    %161 = vmatpush1.bf16.msra.mxu0 %v144
    %162 = vmatprep.subr.bf16.mxu0 0
    %163 = vmatpush1.bf16.msra.mxu0 %v145
    %164 = vmatprep.subr.bf16.mxu0 0
    %165 = vmatpush1.bf16.msra.mxu0 %v146
    %166 = vmatprep.subr.bf16.mxu0 0
    %167 = vmatpush1.bf16.msra.mxu0 %v147
    %168 = vmatprep.subr.bf16.mxu0 0
    %169 = vmatpush1.bf16.msra.mxu0 %v148
    %170 = vmatprep.subr.bf16.mxu0 0
    %171 = vmatpush1.bf16.msra.mxu0 %v149
    %172 = vmatprep.subr.bf16.mxu0 0
    %173 = vmatpush1.bf16.msra.mxu0 %v150
    %174 = vmatprep.subr.bf16.mxu0 0
    %175 = vmatpush1.bf16.msra.mxu0 %v151
    %176 = vmatprep.subr.bf16.mxu0 0
    %177 = vmatpush1.bf16.msra.mxu0 0
    %178 = vmatprep.subr.bf16.mxu0 0
    %179 = vmatpush1.bf16.msra.mxu0 0
    %180 = vmatprep.subr.bf16.mxu0 0
    %181 = vmatpush1.bf16.msra.mxu0 0
    %182 = vmatprep.subr.bf16.mxu0 0
    %183 = vmatpush1.bf16.msra.mxu0 0
    %184 = vmatprep.subr.bf16.mxu0 0
    %185 = vmatpush1.bf16.msra.mxu0 0
    %186 = vmatprep.subr.bf16.mxu0 0
    %187 = vmatpush1.bf16.msra.mxu0 0
    %188 = vmatprep.subr.bf16.mxu0 0
    %189 = vmatpush1.bf16.msra.mxu0 0
    %190 = vmatprep.subr.bf16.mxu0 0
    %191 = vmatpush1.bf16.msra.mxu0 0
    %192 = vmatprep.mubr.bf16.mxu0 0
    %193 = vmatmul.mubr.bf16.gmra.mrb[0].mxu0 %v92
    %v194 = vpop.f32.mrb[0].mxu0
    %v195 = vadd.f32 0.0, %v194
    %v196 = vpop.f32.mrb[0].mxu0
    %v197 = vpop.f32.mrb[0].mxu0
    %v198 = vadd.f32 0.0, %v197
    %v199 = vpop.f32.mrb[0].mxu0
    %200 = vmatprep.mubr.bf16.mxu0 0
    %201 = vmatmul.mubr.bf16.gmra.mrb[0].mxu0 %v93
    %v202 = vpop.f32.mrb[0].mxu0
    %v203 = vadd.f32 0.0, %v202
    %v204 = vpop.f32.mrb[0].mxu0
    %v205 = vpop.f32.mrb[0].mxu0
    %v206 = vadd.f32 0.0, %v205
    %v207 = vpop.f32.mrb[0].mxu0
    %208 = vmatprep.mubr.bf16.mxu0 0
    %209 = vmatmul.mubr.bf16.gmra.mrb[0].mxu0 %v94
    %v210 = vpop.f32.mrb[0].mxu0
    %v211 = vadd.f32 0.0, %v210
    %v212 = vpop.f32.mrb[0].mxu0
    %v213 = vpop.f32.mrb[0].mxu0
    %v214 = vadd.f32 0.0, %v213
    %v215 = vpop.f32.mrb[0].mxu0
    %216 = vmatprep.mubr.bf16.mxu0 0
    %217 = vmatmul.mubr.bf16.gmra.mrb[0].mxu0 %v95
    %v218 = vpop.f32.mrb[0].mxu0
    %v219 = vadd.f32 0.0, %v218
    %v220 = vpop.f32.mrb[0].mxu0
    %v221 = vpop.f32.mrb[0].mxu0
    %v222 = vadd.f32 0.0, %v221
    %v223 = vpop.f32.mrb[0].mxu0
    %224 = vdwg.mxu0
    %v225 = vld [vmem:[%s2] sm:$0xf]
    %v226 = vld [vmem:[%s2 + $0x4] sm:$0xf]
    %v227 = vld [vmem:[%s2 + $0x8] sm:$0xf]
    %v228 = vld [vmem:[%s2 + $0xc] sm:$0xf]
    %v233 = vunpack.c.l.b16 %v225
    %v234 = vunpack.c.l.b16 %v226
    %v235 = vunpack.c.l.b16 %v227
    %v236 = vunpack.c.l.b16 %v228
    %v237 = vpack.c.b16 %v234, %v233
    %v238 = vpack.c.b16 %v236, %v235
    %vm241 = vcmask 261120
    %v243 = vsel %vm241, 0, 0
    %245 = vmatprep.subr.bf16.mxu0 0
    %246 = vmatpush1.bf16.msra.mxu0 %v237
    %247 = vmatprep.subr.bf16.mxu0 0
    %248 = vmatpush1.bf16.msra.mxu0 %v238
    %249 = vmatprep.subr.bf16.mxu0 0
    %250 = vmatpush1.bf16.msra.mxu0 0
    %251 = vmatprep.subr.bf16.mxu0 0
    %252 = vmatpush1.bf16.msra.mxu0 0
    %253 = vmatprep.subr.bf16.mxu0 0
    %254 = vmatpush1.bf16.msra.mxu0 0
    %255 = vmatprep.subr.bf16.mxu0 0
    %256 = vmatpush1.bf16.msra.mxu0 0
    %257 = vmatprep.subr.bf16.mxu0 0
    %258 = vmatpush1.bf16.msra.mxu0 0
    %259 = vmatprep.subr.bf16.mxu0 0
    %260 = vmatpush1.bf16.msra.mxu0 0
    %261 = vmatprep.subr.bf16.mxu0 0
    %262 = vmatpush1.bf16.msra.mxu0 0
    %263 = vmatprep.subr.bf16.mxu0 0
    %264 = vmatpush1.bf16.msra.mxu0 0
    %265 = vmatprep.subr.bf16.mxu0 0
    %266 = vmatpush1.bf16.msra.mxu0 0
    %267 = vmatprep.subr.bf16.mxu0 0
    %268 = vmatpush1.bf16.msra.mxu0 0
    %269 = vmatprep.subr.bf16.mxu0 0
    %270 = vmatpush1.bf16.msra.mxu0 0
    %271 = vmatprep.subr.bf16.mxu0 0
    %272 = vmatpush1.bf16.msra.mxu0 0
    %273 = vmatprep.subr.bf16.mxu0 0
    %274 = vmatpush1.bf16.msra.mxu0 0
    %275 = vmatprep.subr.bf16.mxu0 0
    %276 = vmatpush1.bf16.msra.mxu0 0
    %277 = vmatprep.mubr.bf16.mxu0 0
    %278 = vmatmul.mubr.bf16.gmra.mrb[0].mxu0 %v243
    %v279 = vpop.f32.mrb[0].mxu0
    %v280 = vadd.f32 0.0, %v279
    %v281 = vpop.f32.mrb[0].mxu0
    %v282 = vpop.f32.mrb[0].mxu0
    %v283 = vpop.f32.mrb[0].mxu0
    %284 = vdwg.mxu0
    %v285 = vadd.f32 %v195, %v280
    %v286 = vxor.u32 %v285, 2147483648
    %v287 = vmul.f32 %v286, 1.442695
    %v288 = vpow.pop %v287
    %v289 = vadd.f32 %v288, 1.0
    %v290 = vrcp.pop %v289
    %v291 = vmul.f32 1.0, %v290
    %v292 = vtanh.pop %v285
    %v293 = vmul.f32 %v291, 0.0
    %295 = vrot.lane.b32.xlu0 %v292, 32
    %v296 = vpop.permute.xlu0 %295
    %v298 = vmul.f32 %v291, %v296
    %300 = vrot.lane.b32.xlu0 %v298, 32
    %v301 = vpop.permute.xlu0 %300
    %v303 = vadd.f32 %v293, %v301
    %v304 = vtanh.pop %v303
    %306 = vrot.lane.b32.xlu0 %v304, 32
    %v307 = vpop.permute.xlu0 %306
    %v309 = vmul.f32 %v291, %v307
    %v310 = vpack.c.bf16 %v309, %v309
    %312 = vrot.lane.b32.xlu0 %v310, 64
    %v313 = vpop.permute.xlu0 %312
    %v315 = vsel %vm241, %v313, 0
    %317 = vmatprep.subr.bf16.mxu0 0
    %318 = vmatpush1.bf16.msra.mxu0 %v237
    %319 = vmatprep.subr.bf16.mxu0 0
    %320 = vmatpush1.bf16.msra.mxu0 %v238
    %321 = vmatprep.subr.bf16.mxu0 0
    %322 = vmatpush1.bf16.msra.mxu0 0
    %323 = vmatprep.subr.bf16.mxu0 0
    %324 = vmatpush1.bf16.msra.mxu0 0
    %325 = vmatprep.subr.bf16.mxu0 0
    %326 = vmatpush1.bf16.msra.mxu0 0
    %327 = vmatprep.subr.bf16.mxu0 0
    %328 = vmatpush1.bf16.msra.mxu0 0
    %329 = vmatprep.subr.bf16.mxu0 0
    %330 = vmatpush1.bf16.msra.mxu0 0
    %331 = vmatprep.subr.bf16.mxu0 0
    %332 = vmatpush1.bf16.msra.mxu0 0
    %333 = vmatprep.subr.bf16.mxu0 0
    %334 = vmatpush1.bf16.msra.mxu0 0
    %335 = vmatprep.subr.bf16.mxu0 0
    %336 = vmatpush1.bf16.msra.mxu0 0
    %337 = vmatprep.subr.bf16.mxu0 0
    %338 = vmatpush1.bf16.msra.mxu0 0
    %339 = vmatprep.subr.bf16.mxu0 0
    %340 = vmatpush1.bf16.msra.mxu0 0
    %341 = vmatprep.subr.bf16.mxu0 0
    %342 = vmatpush1.bf16.msra.mxu0 0
    %343 = vmatprep.subr.bf16.mxu0 0
    %344 = vmatpush1.bf16.msra.mxu0 0
    %345 = vmatprep.subr.bf16.mxu0 0
    %346 = vmatpush1.bf16.msra.mxu0 0
    %347 = vmatprep.subr.bf16.mxu0 0
    %348 = vmatpush1.bf16.msra.mxu0 0
    %349 = vmatprep.mubr.bf16.mxu0 0
    %350 = vmatmul.mubr.bf16.gmra.mrb[0].mxu0 %v315
    %v351 = vpop.f32.mrb[0].mxu0
    %v352 = vadd.f32 0.0, %v351
    %v353 = vpop.f32.mrb[0].mxu0
    %v354 = vpop.f32.mrb[0].mxu0
    %v355 = vpop.f32.mrb[0].mxu0
    %356 = vdwg.mxu0
    %v357 = vadd.f32 %v198, %v352
    %v358 = vxor.u32 %v357, 2147483648
    %v359 = vmul.f32 %v358, 1.442695
    %v360 = vpow.pop %v359
    %v361 = vadd.f32 %v360, 1.0
    %v362 = vrcp.pop %v361
    %v363 = vmul.f32 1.0, %v362
    %v364 = vtanh.pop %v357
    %v365 = vmul.f32 %v363, %v303
    %367 = vrot.lane.b32.xlu0 %v364, 32
    %v368 = vpop.permute.xlu0 %367
    %v370 = vmul.f32 %v363, %v368
    %372 = vrot.lane.b32.xlu0 %v370, 32
    %v373 = vpop.permute.xlu0 %372
    %v375 = vadd.f32 %v365, %v373
    %v376 = vtanh.pop %v375
    %378 = vrot.lane.b32.xlu0 %v376, 32
    %v379 = vpop.permute.xlu0 %378
    %v381 = vmul.f32 %v363, %v379
    %v382 = vpack.c.bf16 %v381, %v381
    %384 = vrot.lane.b32.xlu0 %v382, 64
    %v385 = vpop.permute.xlu0 %384
    %v387 = vsel %vm241, %v385, 0
    %389 = vmatprep.subr.bf16.mxu0 0
    %390 = vmatpush1.bf16.msra.mxu0 %v237
    %391 = vmatprep.subr.bf16.mxu0 0
    %392 = vmatpush1.bf16.msra.mxu0 %v238
    %393 = vmatprep.subr.bf16.mxu0 0
    %394 = vmatpush1.bf16.msra.mxu0 0
    %395 = vmatprep.subr.bf16.mxu0 0
    %396 = vmatpush1.bf16.msra.mxu0 0
    %397 = vmatprep.subr.bf16.mxu0 0
    %398 = vmatpush1.bf16.msra.mxu0 0
    %399 = vmatprep.subr.bf16.mxu0 0
    %400 = vmatpush1.bf16.msra.mxu0 0
    %401 = vmatprep.subr.bf16.mxu0 0
    %402 = vmatpush1.bf16.msra.mxu0 0
    %403 = vmatprep.subr.bf16.mxu0 0
    %404 = vmatpush1.bf16.msra.mxu0 0
    %405 = vmatprep.subr.bf16.mxu0 0
    %406 = vmatpush1.bf16.msra.mxu0 0
    %407 = vmatprep.subr.bf16.mxu0 0
    %408 = vmatpush1.bf16.msra.mxu0 0
    %409 = vmatprep.subr.bf16.mxu0 0
    %410 = vmatpush1.bf16.msra.mxu0 0
    %411 = vmatprep.subr.bf16.mxu0 0
    %412 = vmatpush1.bf16.msra.mxu0 0
    %413 = vmatprep.subr.bf16.mxu0 0
    %414 = vmatpush1.bf16.msra.mxu0 0
    %415 = vmatprep.subr.bf16.mxu0 0
    %416 = vmatpush1.bf16.msra.mxu0 0
    %417 = vmatprep.subr.bf16.mxu0 0
    %418 = vmatpush1.bf16.msra.mxu0 0
    %419 = vmatprep.subr.bf16.mxu0 0
    %420 = vmatpush1.bf16.msra.mxu0 0
    %421 = vmatprep.mubr.bf16.mxu0 0
    %422 = vmatmul.mubr.bf16.gmra.mrb[0].mxu0 %v387
    %v423 = vpop.f32.mrb[0].mxu0
    %v424 = vadd.f32 0.0, %v423
    %v425 = vpop.f32.mrb[0].mxu0
    %v426 = vpop.f32.mrb[0].mxu0
    %v427 = vpop.f32.mrb[0].mxu0
    %428 = vdwg.mxu0
    %v429 = vadd.f32 %v203, %v424
    %v430 = vxor.u32 %v429, 2147483648
    %v431 = vmul.f32 %v430, 1.442695
    %v432 = vpow.pop %v431
    %v433 = vadd.f32 %v432, 1.0
    %v434 = vrcp.pop %v433
    %v435 = vmul.f32 1.0, %v434
    %v436 = vtanh.pop %v429
    %v437 = vmul.f32 %v435, %v375
    %439 = vrot.lane.b32.xlu0 %v436, 32
    %v440 = vpop.permute.xlu0 %439
    %v442 = vmul.f32 %v435, %v440
    %444 = vrot.lane.b32.xlu0 %v442, 32
    %v445 = vpop.permute.xlu0 %444
    %v447 = vadd.f32 %v437, %v445
    %v448 = vtanh.pop %v447
    %450 = vrot.lane.b32.xlu0 %v448, 32
    %v451 = vpop.permute.xlu0 %450
    %v453 = vmul.f32 %v435, %v451
    %v454 = vpack.c.bf16 %v453, %v453
    %456 = vrot.lane.b32.xlu0 %v454, 64
    %v457 = vpop.permute.xlu0 %456
    %v459 = vsel %vm241, %v457, 0
    %461 = vmatprep.subr.bf16.mxu0 0
    %462 = vmatpush1.bf16.msra.mxu0 %v237
    %463 = vmatprep.subr.bf16.mxu0 0
    %464 = vmatpush1.bf16.msra.mxu0 %v238
    %465 = vmatprep.subr.bf16.mxu0 0
    %466 = vmatpush1.bf16.msra.mxu0 0
    %467 = vmatprep.subr.bf16.mxu0 0
    %468 = vmatpush1.bf16.msra.mxu0 0
    %469 = vmatprep.subr.bf16.mxu0 0
    %470 = vmatpush1.bf16.msra.mxu0 0
    %471 = vmatprep.subr.bf16.mxu0 0
    %472 = vmatpush1.bf16.msra.mxu0 0
    %473 = vmatprep.subr.bf16.mxu0 0
    %474 = vmatpush1.bf16.msra.mxu0 0
    %475 = vmatprep.subr.bf16.mxu0 0
    %476 = vmatpush1.bf16.msra.mxu0 0
    %477 = vmatprep.subr.bf16.mxu0 0
    %478 = vmatpush1.bf16.msra.mxu0 0
    %479 = vmatprep.subr.bf16.mxu0 0
    %480 = vmatpush1.bf16.msra.mxu0 0
    %481 = vmatprep.subr.bf16.mxu0 0
    %482 = vmatpush1.bf16.msra.mxu0 0
    %483 = vmatprep.subr.bf16.mxu0 0
    %484 = vmatpush1.bf16.msra.mxu0 0
    %485 = vmatprep.subr.bf16.mxu0 0
    %486 = vmatpush1.bf16.msra.mxu0 0
    %487 = vmatprep.subr.bf16.mxu0 0
    %488 = vmatpush1.bf16.msra.mxu0 0
    %489 = vmatprep.subr.bf16.mxu0 0
    %490 = vmatpush1.bf16.msra.mxu0 0
    %491 = vmatprep.subr.bf16.mxu0 0
    %492 = vmatpush1.bf16.msra.mxu0 0
    %493 = vmatprep.mubr.bf16.mxu0 0
    %494 = vmatmul.mubr.bf16.gmra.mrb[0].mxu0 %v459
    %v495 = vpop.f32.mrb[0].mxu0
    %v496 = vadd.f32 0.0, %v495
    %v497 = vpop.f32.mrb[0].mxu0
    %v498 = vpop.f32.mrb[0].mxu0
    %v499 = vpop.f32.mrb[0].mxu0
    %500 = vdwg.mxu0
    %v501 = vadd.f32 %v206, %v496
    %v502 = vxor.u32 %v501, 2147483648
    %v503 = vmul.f32 %v502, 1.442695
    %v504 = vpow.pop %v503
    %v505 = vadd.f32 %v504, 1.0
    %v506 = vrcp.pop %v505
    %v507 = vmul.f32 1.0, %v506
    %v508 = vtanh.pop %v501
    %v509 = vmul.f32 %v507, %v447
    %511 = vrot.lane.b32.xlu0 %v508, 32
    %v512 = vpop.permute.xlu0 %511
    %v514 = vmul.f32 %v507, %v512
    %516 = vrot.lane.b32.xlu0 %v514, 32
    %v517 = vpop.permute.xlu0 %516
    %v519 = vadd.f32 %v509, %v517
    %v520 = vtanh.pop %v519
    %522 = vrot.lane.b32.xlu0 %v520, 32
    %v523 = vpop.permute.xlu0 %522
    %v525 = vmul.f32 %v507, %v523
    %v526 = vpack.c.bf16 %v525, %v525
    %528 = vrot.lane.b32.xlu0 %v526, 64
    %v529 = vpop.permute.xlu0 %528
    %v531 = vsel %vm241, %v529, 0
    %533 = vmatprep.subr.bf16.mxu0 0
    %534 = vmatpush1.bf16.msra.mxu0 %v237
    %535 = vmatprep.subr.bf16.mxu0 0
    %536 = vmatpush1.bf16.msra.mxu0 %v238
    %537 = vmatprep.subr.bf16.mxu0 0
    %538 = vmatpush1.bf16.msra.mxu0 0
    %539 = vmatprep.subr.bf16.mxu0 0
    %540 = vmatpush1.bf16.msra.mxu0 0
    %541 = vmatprep.subr.bf16.mxu0 0
    %542 = vmatpush1.bf16.msra.mxu0 0
    %543 = vmatprep.subr.bf16.mxu0 0
    %544 = vmatpush1.bf16.msra.mxu0 0
    %545 = vmatprep.subr.bf16.mxu0 0
    %546 = vmatpush1.bf16.msra.mxu0 0
    %547 = vmatprep.subr.bf16.mxu0 0
    %548 = vmatpush1.bf16.msra.mxu0 0
    %549 = vmatprep.subr.bf16.mxu0 0
    %550 = vmatpush1.bf16.msra.mxu0 0
    %551 = vmatprep.subr.bf16.mxu0 0
    %552 = vmatpush1.bf16.msra.mxu0 0
    %553 = vmatprep.subr.bf16.mxu0 0
    %554 = vmatpush1.bf16.msra.mxu0 0
    %555 = vmatprep.subr.bf16.mxu0 0
    %556 = vmatpush1.bf16.msra.mxu0 0
    %557 = vmatprep.subr.bf16.mxu0 0
    %558 = vmatpush1.bf16.msra.mxu0 0
    %559 = vmatprep.subr.bf16.mxu0 0
    %560 = vmatpush1.bf16.msra.mxu0 0
    %561 = vmatprep.subr.bf16.mxu0 0
    %562 = vmatpush1.bf16.msra.mxu0 0
    %563 = vmatprep.subr.bf16.mxu0 0
    %564 = vmatpush1.bf16.msra.mxu0 0
    %565 = vmatprep.mubr.bf16.mxu0 0
    %566 = vmatmul.mubr.bf16.gmra.mrb[0].mxu0 %v531
    %v567 = vpop.f32.mrb[0].mxu0
    %v568 = vadd.f32 0.0, %v567
    %v569 = vpop.f32.mrb[0].mxu0
    %v570 = vpop.f32.mrb[0].mxu0
    %v571 = vpop.f32.mrb[0].mxu0
    %572 = vdwg.mxu0
    %v573 = vadd.f32 %v211, %v568
    %v574 = vxor.u32 %v573, 2147483648
    %v575 = vmul.f32 %v574, 1.442695
    %v576 = vpow.pop %v575
    %v577 = vadd.f32 %v576, 1.0
    %v578 = vrcp.pop %v577
    %v579 = vmul.f32 1.0, %v578
    %v580 = vtanh.pop %v573
    %v581 = vmul.f32 %v579, %v519
    %583 = vrot.lane.b32.xlu0 %v580, 32
    %v584 = vpop.permute.xlu0 %583
    %v586 = vmul.f32 %v579, %v584
    %588 = vrot.lane.b32.xlu0 %v586, 32
    %v589 = vpop.permute.xlu0 %588
    %v591 = vadd.f32 %v581, %v589
    %v592 = vtanh.pop %v591
    %594 = vrot.lane.b32.xlu0 %v592, 32
    %v595 = vpop.permute.xlu0 %594
    %v597 = vmul.f32 %v579, %v595
    %v598 = vpack.c.bf16 %v597, %v597
    %600 = vrot.lane.b32.xlu0 %v598, 64
    %v601 = vpop.permute.xlu0 %600
    %v603 = vsel %vm241, %v601, 0
    %605 = vmatprep.subr.bf16.mxu0 0
    %606 = vmatpush1.bf16.msra.mxu0 %v237
    %607 = vmatprep.subr.bf16.mxu0 0
    %608 = vmatpush1.bf16.msra.mxu0 %v238
    %609 = vmatprep.subr.bf16.mxu0 0
    %610 = vmatpush1.bf16.msra.mxu0 0
    %611 = vmatprep.subr.bf16.mxu0 0
    %612 = vmatpush1.bf16.msra.mxu0 0
    %613 = vmatprep.subr.bf16.mxu0 0
    %614 = vmatpush1.bf16.msra.mxu0 0
    %615 = vmatprep.subr.bf16.mxu0 0
    %616 = vmatpush1.bf16.msra.mxu0 0
    %617 = vmatprep.subr.bf16.mxu0 0
    %618 = vmatpush1.bf16.msra.mxu0 0
    %619 = vmatprep.subr.bf16.mxu0 0
    %620 = vmatpush1.bf16.msra.mxu0 0
    %621 = vmatprep.subr.bf16.mxu0 0
    %622 = vmatpush1.bf16.msra.mxu0 0
    %623 = vmatprep.subr.bf16.mxu0 0
    %624 = vmatpush1.bf16.msra.mxu0 0
    %625 = vmatprep.subr.bf16.mxu0 0
    %626 = vmatpush1.bf16.msra.mxu0 0
    %627 = vmatprep.subr.bf16.mxu0 0
    %628 = vmatpush1.bf16.msra.mxu0 0
    %629 = vmatprep.subr.bf16.mxu0 0
    %630 = vmatpush1.bf16.msra.mxu0 0
    %631 = vmatprep.subr.bf16.mxu0 0
    %632 = vmatpush1.bf16.msra.mxu0 0
    %633 = vmatprep.subr.bf16.mxu0 0
    %634 = vmatpush1.bf16.msra.mxu0 0
    %635 = vmatprep.subr.bf16.mxu0 0
    %636 = vmatpush1.bf16.msra.mxu0 0
    %637 = vmatprep.mubr.bf16.mxu0 0
    %638 = vmatmul.mubr.bf16.gmra.mrb[0].mxu0 %v603
    %v639 = vpop.f32.mrb[0].mxu0
    %v640 = vadd.f32 0.0, %v639
    %v641 = vpop.f32.mrb[0].mxu0
    %v642 = vpop.f32.mrb[0].mxu0
    %v643 = vpop.f32.mrb[0].mxu0
    %644 = vdwg.mxu0
    %v645 = vadd.f32 %v214, %v640
    %v646 = vxor.u32 %v645, 2147483648
    %v647 = vmul.f32 %v646, 1.442695
    %v648 = vpow.pop %v647
    %v649 = vadd.f32 %v648, 1.0
    %v650 = vrcp.pop %v649
    %v651 = vmul.f32 1.0, %v650
    %v652 = vtanh.pop %v645
    %v653 = vmul.f32 %v651, %v591
    %655 = vrot.lane.b32.xlu0 %v652, 32
    %v656 = vpop.permute.xlu0 %655
    %v658 = vmul.f32 %v651, %v656
    %660 = vrot.lane.b32.xlu0 %v658, 32
    %v661 = vpop.permute.xlu0 %660
    %v663 = vadd.f32 %v653, %v661
    %v664 = vtanh.pop %v663
    %666 = vrot.lane.b32.xlu0 %v664, 32
    %v667 = vpop.permute.xlu0 %666
    %v669 = vmul.f32 %v651, %v667
    %v670 = vpack.c.bf16 %v669, %v669
    %672 = vrot.lane.b32.xlu0 %v670, 64
    %v673 = vpop.permute.xlu0 %672
    %v675 = vsel %vm241, %v673, 0
    %677 = vmatprep.subr.bf16.mxu0 0
    %678 = vmatpush1.bf16.msra.mxu0 %v237
    %679 = vmatprep.subr.bf16.mxu0 0
    %680 = vmatpush1.bf16.msra.mxu0 %v238
    %681 = vmatprep.subr.bf16.mxu0 0
    %682 = vmatpush1.bf16.msra.mxu0 0
    %683 = vmatprep.subr.bf16.mxu0 0
    %684 = vmatpush1.bf16.msra.mxu0 0
    %685 = vmatprep.subr.bf16.mxu0 0
    %686 = vmatpush1.bf16.msra.mxu0 0
    %687 = vmatprep.subr.bf16.mxu0 0
    %688 = vmatpush1.bf16.msra.mxu0 0
    %689 = vmatprep.subr.bf16.mxu0 0
    %690 = vmatpush1.bf16.msra.mxu0 0
    %691 = vmatprep.subr.bf16.mxu0 0
    %692 = vmatpush1.bf16.msra.mxu0 0
    %693 = vmatprep.subr.bf16.mxu0 0
    %694 = vmatpush1.bf16.msra.mxu0 0
    %695 = vmatprep.subr.bf16.mxu0 0
    %696 = vmatpush1.bf16.msra.mxu0 0
    %697 = vmatprep.subr.bf16.mxu0 0
    %698 = vmatpush1.bf16.msra.mxu0 0
    %699 = vmatprep.subr.bf16.mxu0 0
    %700 = vmatpush1.bf16.msra.mxu0 0
    %701 = vmatprep.subr.bf16.mxu0 0
    %702 = vmatpush1.bf16.msra.mxu0 0
    %703 = vmatprep.subr.bf16.mxu0 0
    %704 = vmatpush1.bf16.msra.mxu0 0
    %705 = vmatprep.subr.bf16.mxu0 0
    %706 = vmatpush1.bf16.msra.mxu0 0
    %707 = vmatprep.subr.bf16.mxu0 0
    %708 = vmatpush1.bf16.msra.mxu0 0
    %709 = vmatprep.mubr.bf16.mxu0 0
    %710 = vmatmul.mubr.bf16.gmra.mrb[0].mxu0 %v675
    %v711 = vpop.f32.mrb[0].mxu0
    %v712 = vadd.f32 0.0, %v711
    %v713 = vpop.f32.mrb[0].mxu0
    %v714 = vpop.f32.mrb[0].mxu0
    %v715 = vpop.f32.mrb[0].mxu0
    %716 = vdwg.mxu0
    %v717 = vadd.f32 %v219, %v712
    %v718 = vxor.u32 %v717, 2147483648
    %v719 = vmul.f32 %v718, 1.442695
    %v720 = vpow.pop %v719
    %v721 = vadd.f32 %v720, 1.0
    %v722 = vrcp.pop %v721
    %v723 = vmul.f32 1.0, %v722
    %v724 = vtanh.pop %v717
    %v725 = vmul.f32 %v723, %v663
    %727 = vrot.lane.b32.xlu0 %v724, 32
    %v728 = vpop.permute.xlu0 %727
    %v730 = vmul.f32 %v723, %v728
    %732 = vrot.lane.b32.xlu0 %v730, 32
    %v733 = vpop.permute.xlu0 %732
    %v735 = vadd.f32 %v725, %v733
    %v736 = vtanh.pop %v735
    %738 = vrot.lane.b32.xlu0 %v736, 32
    %v739 = vpop.permute.xlu0 %738
    %v741 = vmul.f32 %v723, %v739
    %v742 = vpack.c.bf16 %v741, %v741
    %744 = vrot.lane.b32.xlu0 %v742, 64
    %v745 = vpop.permute.xlu0 %744
    %v747 = vsel %vm241, %v745, 0
    %749 = vmatprep.subr.bf16.mxu0 0
    %750 = vmatpush1.bf16.msra.mxu0 %v237
    %751 = vmatprep.subr.bf16.mxu0 0
    %752 = vmatpush1.bf16.msra.mxu0 %v238
    %753 = vmatprep.subr.bf16.mxu0 0
    %754 = vmatpush1.bf16.msra.mxu0 0
    %755 = vmatprep.subr.bf16.mxu0 0
    %756 = vmatpush1.bf16.msra.mxu0 0
    %757 = vmatprep.subr.bf16.mxu0 0
    %758 = vmatpush1.bf16.msra.mxu0 0
    %759 = vmatprep.subr.bf16.mxu0 0
    %760 = vmatpush1.bf16.msra.mxu0 0
    %761 = vmatprep.subr.bf16.mxu0 0
    %762 = vmatpush1.bf16.msra.mxu0 0
    %763 = vmatprep.subr.bf16.mxu0 0
    %764 = vmatpush1.bf16.msra.mxu0 0
    %765 = vmatprep.subr.bf16.mxu0 0
    %766 = vmatpush1.bf16.msra.mxu0 0
    %767 = vmatprep.subr.bf16.mxu0 0
    %768 = vmatpush1.bf16.msra.mxu0 0
    %769 = vmatprep.subr.bf16.mxu0 0
    %770 = vmatpush1.bf16.msra.mxu0 0
    %771 = vmatprep.subr.bf16.mxu0 0
    %772 = vmatpush1.bf16.msra.mxu0 0
    %773 = vmatprep.subr.bf16.mxu0 0
    %774 = vmatpush1.bf16.msra.mxu0 0
    %775 = vmatprep.subr.bf16.mxu0 0
    %776 = vmatpush1.bf16.msra.mxu0 0
    %777 = vmatprep.subr.bf16.mxu0 0
    %778 = vmatpush1.bf16.msra.mxu0 0
    %779 = vmatprep.subr.bf16.mxu0 0
    %780 = vmatpush1.bf16.msra.mxu0 0
    %781 = vmatprep.mubr.bf16.mxu0 0
    %782 = vmatmul.mubr.bf16.gmra.mrb[0].mxu0 %v747
    %v783 = vpop.f32.mrb[0].mxu0
    %v784 = vadd.f32 0.0, %v783
    %v785 = vpop.f32.mrb[0].mxu0
    %v786 = vpop.f32.mrb[0].mxu0
    %v787 = vpop.f32.mrb[0].mxu0
    %788 = vdwg.mxu0
    %v789 = vadd.f32 %v222, %v784
    %v790 = vxor.u32 %v789, 2147483648
    %v791 = vmul.f32 %v790, 1.442695
    %v792 = vpow.pop %v791
    %v793 = vadd.f32 %v792, 1.0
    %v794 = vrcp.pop %v793
    %v795 = vmul.f32 1.0, %v794
    %v796 = vtanh.pop %v789
    %v797 = vmul.f32 %v795, %v735
    %799 = vrot.lane.b32.xlu0 %v796, 32
    %v800 = vpop.permute.xlu0 %799
    %v802 = vmul.f32 %v795, %v800
    %804 = vrot.lane.b32.xlu0 %v802, 32
    %v805 = vpop.permute.xlu0 %804
    %v807 = vadd.f32 %v797, %v805
    %v808 = vtanh.pop %v807
    %810 = vrot.lane.b32.xlu0 %v808, 32
    %v811 = vpop.permute.xlu0 %810
    %v813 = vmul.f32 %v795, %v811
    %v815 = vrot.slane %v813, 4
    %v817 = vmul.f32 %v813, %v815
    %818 = vrot.lane.b32.xlu0 %v813, 64
    %v819 = vpop.permute.xlu0 %818
    %821 = vrot.lane.b32.xlu0 %v815, 96
    %v822 = vpop.permute.xlu0 %821
    %v824 = vsel %vm241, %v819, %v822
    %vm825 = vcmask 523264
    %v826 = vsel %vm825, %v824, %v817
    %v827 = vld [vmem:[%s3] sm:$0xff]
    %v828 = vld [vmem:[%s3 + $0x8] sm:$0xff]
    %v829 = vld [vmem:[%s3 + $0x10] sm:$0xff]
    %v830 = vld [vmem:[%s3 + $0x18] sm:$0xff]
    %v831 = vld [vmem:[%s3 + $0x20] sm:$0xff]
    %v832 = vld [vmem:[%s3 + $0x28] sm:$0xff]
    %v833 = vld [vmem:[%s3 + $0x30] sm:$0xff]
    %v834 = vld [vmem:[%s3 + $0x38] sm:$0xff]
    %v835 = vld [vmem:[%s3 + $0x40] sm:$0xff]
    %v836 = vld [vmem:[%s3 + $0x48] sm:$0xff]
    %v837 = vld [vmem:[%s3 + $0x50] sm:$0xff]
    %v838 = vld [vmem:[%s3 + $0x58] sm:$0xff]
    %v839 = vld [vmem:[%s4] sm:$0x1]
    %v841 = vlaneseq
    %v842 = vshrl.u32 %v841, 7
    %v843 = vsub.s32 0, %v842
    %v844 = vrot.slane %v839, %v843
    %vm846 = vcmask 785408
    %v848 = vsel %vm846, %v826, 0
    %850 = vmatprep.subr.mxu0 0.0
    %851 = vmatpush1.msra.mxu0 %v827
    %852 = vmatprep.subr.mxu0 0.0
    %853 = vmatpush1.msra.mxu0 %v828
    %854 = vmatprep.subr.mxu0 0.0
    %855 = vmatpush1.msra.mxu0 %v829
    %856 = vmatprep.subr.mxu0 0.0
    %857 = vmatpush1.msra.mxu0 %v830
    %858 = vmatprep.subr.mxu0 0.0
    %859 = vmatpush1.msra.mxu0 %v831
    %860 = vmatprep.subr.mxu0 0.0
    %861 = vmatpush1.msra.mxu0 %v832
    %862 = vmatprep.subr.mxu0 0.0
    %863 = vmatpush1.msra.mxu0 %v833
    %864 = vmatprep.subr.mxu0 0.0
    %865 = vmatpush1.msra.mxu0 %v834
    %866 = vmatprep.subr.mxu0 0.0
    %867 = vmatpush1.msra.mxu0 %v835
    %868 = vmatprep.subr.mxu0 0.0
    %869 = vmatpush1.msra.mxu0 %v836
    %870 = vmatprep.subr.mxu0 0.0
    %871 = vmatpush1.msra.mxu0 %v837
    %872 = vmatprep.subr.mxu0 0.0
    %873 = vmatpush1.msra.mxu0 %v838
    %874 = vmatprep.subr.mxu0 0.0
    %875 = vmatpush1.msra.mxu0 0.0
    %876 = vmatprep.subr.mxu0 0.0
    %877 = vmatpush1.msra.mxu0 0.0
    %878 = vmatprep.subr.mxu0 0.0
    %879 = vmatpush1.msra.mxu0 0.0
    %880 = vmatprep.subr.mxu0 0.0
    %881 = vmatpush1.msra.mxu0 0.0
    %882 = vmatprep.subr.mxu0 0.0
    %883 = vmatpush1.msra.mxu0 0.0
    %884 = vmatprep.subr.mxu0 0.0
    %885 = vmatpush1.msra.mxu0 0.0
    %886 = vmatprep.subr.mxu0 0.0
    %887 = vmatpush1.msra.mxu0 0.0
    %888 = vmatprep.subr.mxu0 0.0
    %889 = vmatpush1.msra.mxu0 0.0
    %890 = vmatprep.subr.mxu0 0.0
    %891 = vmatpush1.msra.mxu0 0.0
    %892 = vmatprep.subr.mxu0 0.0
    %893 = vmatpush1.msra.mxu0 0.0
    %894 = vmatprep.subr.mxu0 0.0
    %895 = vmatpush1.msra.mxu0 0.0
    %896 = vmatprep.subr.mxu0 0.0
    %897 = vmatpush1.msra.mxu0 0.0
    %898 = vmatprep.subr.mxu0 0.0
    %899 = vmatpush1.msra.mxu0 0.0
    %900 = vmatprep.subr.mxu0 0.0
    %901 = vmatpush1.msra.mxu0 0.0
    %902 = vmatprep.subr.mxu0 0.0
    %903 = vmatpush1.msra.mxu0 0.0
    %904 = vmatprep.subr.mxu0 0.0
    %905 = vmatpush1.msra.mxu0 0.0
    %906 = vmatprep.subr.mxu0 0.0
    %907 = vmatpush1.msra.mxu0 0.0
    %908 = vmatprep.subr.mxu0 0.0
    %909 = vmatpush1.msra.mxu0 0.0
    %910 = vmatprep.subr.mxu0 0.0
    %911 = vmatpush1.msra.mxu0 0.0
    %912 = vmatprep.subr.mxu0 0.0
    %913 = vmatpush1.msra.mxu0 0.0
    %914 = vmatprep.mubr.f32.mxu0 0.0
    %915 = vmatmul.mubr.f32.gmra.mrb[0].mxu0 %v848
    %v916 = vpop.f32.mrb[0].mxu0
    %v917 = vadd.f32 %v844, %v916
    %v918 = vpop.f32.mrb[0].mxu0
    %919 = vdwg.mxu0
    %v920 = vmax.f32 %v917, 0.0
    %v921 = vld [vmem:[%s5] sm:$0xff]
    %v922 = vld [vmem:[%s5 + $0x8] sm:$0xff]
    %v923 = vld [vmem:[%s5 + $0x10] sm:$0xff]
    %v924 = vld [vmem:[%s5 + $0x18] sm:$0xff]
    %v925 = vld [vmem:[%s5 + $0x20] sm:$0xff]
    %v926 = vld [vmem:[%s5 + $0x28] sm:$0xff]
    %v927 = vld [vmem:[%s5 + $0x30] sm:$0xff]
    %v928 = vld [vmem:[%s5 + $0x38] sm:$0xff]
    %v929 = vld [vmem:[%s6] sm:$0x1]
    %v931 = vlaneseq
    %v932 = vshrl.u32 %v931, 7
    %v933 = vsub.s32 0, %v932
    %v934 = vrot.slane %v929, %v933
    %v937 = vsel %vm825, %v920, 0
    %939 = vmatprep.subr.mxu0 0.0
    %940 = vmatpush1.msra.mxu0 %v921
    %941 = vmatprep.subr.mxu0 0.0
    %942 = vmatpush1.msra.mxu0 %v922
    %943 = vmatprep.subr.mxu0 0.0
    %944 = vmatpush1.msra.mxu0 %v923
    %945 = vmatprep.subr.mxu0 0.0
    %946 = vmatpush1.msra.mxu0 %v924
    %947 = vmatprep.subr.mxu0 0.0
    %948 = vmatpush1.msra.mxu0 %v925
    %949 = vmatprep.subr.mxu0 0.0
    %950 = vmatpush1.msra.mxu0 %v926
    %951 = vmatprep.subr.mxu0 0.0
    %952 = vmatpush1.msra.mxu0 %v927
    %953 = vmatprep.subr.mxu0 0.0
    %954 = vmatpush1.msra.mxu0 %v928
    %955 = vmatprep.subr.mxu0 0.0
    %956 = vmatpush1.msra.mxu0 0.0
    %957 = vmatprep.subr.mxu0 0.0
    %958 = vmatpush1.msra.mxu0 0.0
    %959 = vmatprep.subr.mxu0 0.0
    %960 = vmatpush1.msra.mxu0 0.0
    %961 = vmatprep.subr.mxu0 0.0
    %962 = vmatpush1.msra.mxu0 0.0
    %963 = vmatprep.subr.mxu0 0.0
    %964 = vmatpush1.msra.mxu0 0.0
    %965 = vmatprep.subr.mxu0 0.0
    %966 = vmatpush1.msra.mxu0 0.0
    %967 = vmatprep.subr.mxu0 0.0
    %968 = vmatpush1.msra.mxu0 0.0
    %969 = vmatprep.subr.mxu0 0.0
    %970 = vmatpush1.msra.mxu0 0.0
    %971 = vmatprep.subr.mxu0 0.0
    %972 = vmatpush1.msra.mxu0 0.0
    %973 = vmatprep.subr.mxu0 0.0
    %974 = vmatpush1.msra.mxu0 0.0
    %975 = vmatprep.subr.mxu0 0.0
    %976 = vmatpush1.msra.mxu0 0.0
    %977 = vmatprep.subr.mxu0 0.0
    %978 = vmatpush1.msra.mxu0 0.0
    %979 = vmatprep.subr.mxu0 0.0
    %980 = vmatpush1.msra.mxu0 0.0
    %981 = vmatprep.subr.mxu0 0.0
    %982 = vmatpush1.msra.mxu0 0.0
    %983 = vmatprep.subr.mxu0 0.0
    %984 = vmatpush1.msra.mxu0 0.0
    %985 = vmatprep.subr.mxu0 0.0
    %986 = vmatpush1.msra.mxu0 0.0
    %987 = vmatprep.subr.mxu0 0.0
    %988 = vmatpush1.msra.mxu0 0.0
    %989 = vmatprep.subr.mxu0 0.0
    %990 = vmatpush1.msra.mxu0 0.0
    %991 = vmatprep.subr.mxu0 0.0
    %992 = vmatpush1.msra.mxu0 0.0
    %993 = vmatprep.subr.mxu0 0.0
    %994 = vmatpush1.msra.mxu0 0.0
    %995 = vmatprep.subr.mxu0 0.0
    %996 = vmatpush1.msra.mxu0 0.0
    %997 = vmatprep.subr.mxu0 0.0
    %998 = vmatpush1.msra.mxu0 0.0
    %999 = vmatprep.subr.mxu0 0.0
    %1000 = vmatpush1.msra.mxu0 0.0
    %1001 = vmatprep.subr.mxu0 0.0
    %1002 = vmatpush1.msra.mxu0 0.0
    %1003 = vmatprep.mubr.f32.mxu0 0.0
    %1004 = vmatmul.mubr.f32.gmra.mrb[0].mxu0 %v937
    %v1005 = vpop.f32.mrb[0].mxu0
    %v1006 = vadd.f32 %v934, %v1005
    %v1007 = vpop.f32.mrb[0].mxu0
    %1008 = vdwg.mxu0
    %v1009 = vmax.f32 %v1006, 0.0
    %v1010 = vld [vmem:[%s7] sm:$0xff]
    %v1011 = vld [vmem:[%s7 + $0x8] sm:$0xff]
    %v1012 = vld [vmem:[%s7 + $0x10] sm:$0xff]
    %v1013 = vld [vmem:[%s7 + $0x18] sm:$0xff]
    %v1014 = vld [vmem:[%s7 + $0x20] sm:$0xff]
    %v1015 = vld [vmem:[%s7 + $0x28] sm:$0xff]
    %v1016 = vld [vmem:[%s7 + $0x30] sm:$0xff]
    %v1017 = vld [vmem:[%s7 + $0x38] sm:$0xff]
    %v1018 = vld [vmem:[%s8] sm:$0x1]
    %v1020 = vlaneseq
    %v1021 = vshrl.u32 %v1020, 7
    %v1022 = vsub.s32 0, %v1021
    %v1023 = vrot.slane %v1018, %v1022
    %v1026 = vsel %vm825, %v1009, 0
    %1028 = vmatprep.subr.mxu0 0.0
    %1029 = vmatpush1.msra.mxu0 %v1010
    %1030 = vmatprep.subr.mxu0 0.0
    %1031 = vmatpush1.msra.mxu0 %v1011
    %1032 = vmatprep.subr.mxu0 0.0
    %1033 = vmatpush1.msra.mxu0 %v1012
    %1034 = vmatprep.subr.mxu0 0.0
    %1035 = vmatpush1.msra.mxu0 %v1013
    %1036 = vmatprep.subr.mxu0 0.0
    %1037 = vmatpush1.msra.mxu0 %v1014
    %1038 = vmatprep.subr.mxu0 0.0
    %1039 = vmatpush1.msra.mxu0 %v1015
    %1040 = vmatprep.subr.mxu0 0.0
    %1041 = vmatpush1.msra.mxu0 %v1016
    %1042 = vmatprep.subr.mxu0 0.0
    %1043 = vmatpush1.msra.mxu0 %v1017
    %1044 = vmatprep.subr.mxu0 0.0
    %1045 = vmatpush1.msra.mxu0 0.0
    %1046 = vmatprep.subr.mxu0 0.0
    %1047 = vmatpush1.msra.mxu0 0.0
    %1048 = vmatprep.subr.mxu0 0.0
    %1049 = vmatpush1.msra.mxu0 0.0
    %1050 = vmatprep.subr.mxu0 0.0
    %1051 = vmatpush1.msra.mxu0 0.0
    %1052 = vmatprep.subr.mxu0 0.0
    %1053 = vmatpush1.msra.mxu0 0.0
    %1054 = vmatprep.subr.mxu0 0.0
    %1055 = vmatpush1.msra.mxu0 0.0
    %1056 = vmatprep.subr.mxu0 0.0
    %1057 = vmatpush1.msra.mxu0 0.0
    %1058 = vmatprep.subr.mxu0 0.0
    %1059 = vmatpush1.msra.mxu0 0.0
    %1060 = vmatprep.subr.mxu0 0.0
    %1061 = vmatpush1.msra.mxu0 0.0
    %1062 = vmatprep.subr.mxu0 0.0
    %1063 = vmatpush1.msra.mxu0 0.0
    %1064 = vmatprep.subr.mxu0 0.0
    %1065 = vmatpush1.msra.mxu0 0.0
    %1066 = vmatprep.subr.mxu0 0.0
    %1067 = vmatpush1.msra.mxu0 0.0
    %1068 = vmatprep.subr.mxu0 0.0
    %1069 = vmatpush1.msra.mxu0 0.0
    %1070 = vmatprep.subr.mxu0 0.0
    %1071 = vmatpush1.msra.mxu0 0.0
    %1072 = vmatprep.subr.mxu0 0.0
    %1073 = vmatpush1.msra.mxu0 0.0
    %1074 = vmatprep.subr.mxu0 0.0
    %1075 = vmatpush1.msra.mxu0 0.0
    %1076 = vmatprep.subr.mxu0 0.0
    %1077 = vmatpush1.msra.mxu0 0.0
    %1078 = vmatprep.subr.mxu0 0.0
    %1079 = vmatpush1.msra.mxu0 0.0
    %1080 = vmatprep.subr.mxu0 0.0
    %1081 = vmatpush1.msra.mxu0 0.0
    %1082 = vmatprep.subr.mxu0 0.0
    %1083 = vmatpush1.msra.mxu0 0.0
    %1084 = vmatprep.subr.mxu0 0.0
    %1085 = vmatpush1.msra.mxu0 0.0
    %1086 = vmatprep.subr.mxu0 0.0
    %1087 = vmatpush1.msra.mxu0 0.0
    %1088 = vmatprep.subr.mxu0 0.0
    %1089 = vmatpush1.msra.mxu0 0.0
    %1090 = vmatprep.subr.mxu0 0.0
    %1091 = vmatpush1.msra.mxu0 0.0
    %1092 = vmatprep.mubr.f32.mxu0 0.0
    %1093 = vmatmul.mubr.f32.gmra.mrb[0].mxu0 %v1026
    %v1094 = vpop.f32.mrb[0].mxu0
    %v1095 = vadd.f32 %v1023, %v1094
    %v1096 = vpop.f32.mrb[0].mxu0
    %1097 = vdwg.mxu0
    %vm1098 = vcmask 19456
    %1099 = vst.msk [vmem:[#allocation2] sm:$0xf] %vm1098, %v1095
    // Predicated region
    $region38: #{snli_forward.1} parent=1 // pred_check
      _
    $region39: #{snli_forward.1} parent=1 // pred_check_branch
      %1101 = sbr.rel (0) target = $region41
    $region40: #{snli_forward.1} parent=1 // pred_region
      %s1103 = ssub.s32 64, 64
      %1104 = vsyncadd [#allocation3], %s1103
      %s1106 = sshll.u32 [#allocation2], 4
      %s1107 = int_to_ptr.vmem [resolvable:$true] %s1106
      %1109 = dma.vmem_to_hbm [thread:$0]  %s1107, 64, %s9, [#allocation3]
    $region41: #{snli_forward.1} parent=1 // pred_fallthru
      _
    // Predicated region
    $region42: #{snli_forward.1} parent=1 // pred_check
      _
    $region43: #{snli_forward.1} parent=1 // pred_check_branch
      %1111 = sbr.rel (0) target = $region45
    $region44: #{snli_forward.1} parent=1 // pred_region
      %1112 = dma.done [#allocation3], 64
    $region45: #{snli_forward.1} parent=1 // pred_fallthru
      _
    %1113 = vsyncpa [#allocation3], 1

</llo_original>
